<compile_context>
chip_gen: v7x
topology: tpu7x:2x2x1
jax: 0.10.0
libtpu: 0.0.40
codegen_flags: <defaults>
</compile_context>

<pallas_src>
import functools

import jax
import jax.numpy as jnp
from jax import lax
from jax.experimental import pallas as pl
from jax.experimental.pallas import tpu as pltpu


def _round_up(v, m):
    return ((v + m - 1) // m) * m


# ----------------------------------------------------------------------------
# Kernel: 3 deformable convs + 1x1-conv residual on a (CH, N) slab that packs
# BB length-L sequences along the lane axis (N = BB * L).
# ----------------------------------------------------------------------------
def _resblock_kernel(x_ref, tapm_ref, w_off_ref, w_main_ref, b_ref, res_w_ref,
                     out_ref, s_scr, *, K, L, BB, CH, pad):
    f32 = jnp.float32
    N = BB * L

    # hoisted per-block constants (tiny; the O(N^2) mask constants of the old
    # version no longer exist, and the static-conv edge masks come precomputed
    # from the wrapper via tapm_ref).
    row_loc = lax.broadcasted_iota(jnp.int32, (L, 1), 0).astype(f32)  # src pos in seq
    col_loc = lax.broadcasted_iota(jnp.int32, (1, L), 1).astype(f32)  # dst pos in seq
    tapm = tapm_ref[...]                                              # (K, N) f32

    x = x_ref[...]                                                    # (CH, N) f32

    def lane_shift(v, d):
        """out[:, n] = v[:, n + d] with zero fill at the slab edges (static d)."""
        if d == 0:
            return v
        z = jnp.zeros((v.shape[0], abs(d)), v.dtype)
        if d > 0:
            return jnp.concatenate([v[:, d:], z], axis=1)
        return jnp.concatenate([z, v[:, :d]], axis=1)

    def deformable(h, w_off_l, b_off, w_main_l, b_main):
        # (1) offset-predicting K-tap 'same' conv: channel-mix first with K
        #     tiny matmuls, shift the small (K, N) results, then mask the
        #     per-sequence edges AFTER the dot (no (CH,N) mask broadcasts).
        off = jnp.zeros((K, N), f32)
        for t in range(K):
            v = jnp.dot(w_off_l[:, t * CH:(t + 1) * CH], h,
                        preferred_element_type=f32)                   # (K, N)
            off = off + lane_shift(v, t - pad) * tapm[t:t + 1, :]
        off = off + b_off                                             # + (K, 1)

        # (2) channel-mix per sampling tap on the full slab: A_k = W_k @ h.
        a_taps = [jnp.dot(w_main_l[k * CH:(k + 1) * CH, :], h,
                          preferred_element_type=f32) for k in range(K)]

        # (3) per-sequence deformable sampling, fused into ONE matmul per
        #     sequence: out_b = [A_0 | .. | A_{K-1}]_b @ S_b, where the
        #     (K*L, L) interpolation matrix S_b is written directly into a
        #     reused VMEM scratch with a fused 3-op hat expression.
        outs = []
        for b in range(BB):
            sl = slice(b * L, (b + 1) * L)
            for k in range(K):
                pos = col_loc + float(k - pad) + off[k:k + 1, sl]     # (1, L) f32
                s_scr[k * L:(k + 1) * L, :] = jnp.maximum(
                    0.0, 1.0 - jnp.abs(pos - row_loc))                # (L, L)
            a_b = jnp.concatenate([a[:, sl] for a in a_taps], axis=1)  # (CH, K*L)
            outs.append(jnp.dot(a_b, s_scr[...], preferred_element_type=f32))
        h_new = outs[0] if BB == 1 else jnp.concatenate(outs, axis=1)
        return h_new + b_main                                         # + (CH, 1)

    h = x
    for li in range(3):                                  # static unroll, 3 layers
        b_li = b_ref[li]                                 # (K + CH, 1)
        h = deformable(h,
                       w_off_ref[li],                    # (K, K*CH)
                       b_li[0:K, :],                     # (K, 1)
                       w_main_ref[li],                   # (K*CH, CH)
                       b_li[K:K + CH, :])                # (CH, 1)

    # residual 1x1 conv (identity weight when dim_in == dim_out); its bias is
    # folded into layer 3's bias wrapper-side.
    res = jnp.dot(res_w_ref[...], x, preferred_element_type=f32)
    out_ref[...] = (h + res).astype(out_ref.dtype)


# ----------------------------------------------------------------------------
# Wrapper: parameter packing + layout plumbing + pallas_call.
# ----------------------------------------------------------------------------
def _pack_params(params, dim_in, dim_out, K, CH):
    """Pack the 14 parameter tensors into 4 slabs (tap-major column order)."""
    in_dims = (dim_in, dim_out, dim_out)
    w_off = jnp.zeros((3, K, K * CH), jnp.float32)
    w_main = jnp.zeros((3, K * CH, CH), jnp.float32)
    b_all = jnp.zeros((3, K + CH, 1), jnp.float32)
    for li, ci in enumerate(in_dims):
        ow = jnp.transpose(params[f"off_w{li + 1}"], (0, 2, 1))       # (K, K_tap, ci)
        ow = jnp.pad(ow, ((0, 0), (0, 0), (0, CH - ci))).reshape(K, K * CH)
        w = jnp.transpose(params[f"w{li + 1}"], (2, 0, 1))            # (K_tap, co, ci)
        w = jnp.pad(w, ((0, 0), (0, CH - dim_out), (0, CH - ci))).reshape(K * CH, CH)
        w_off = w_off.at[li].set(ow)
        w_main = w_main.at[li].set(w)
        b_all = b_all.at[li, 0:K, 0].set(params[f"off_b{li + 1}"])
        b_all = b_all.at[li, K:K + dim_out, 0].set(params[f"b{li + 1}"])
    # fold residual bias into the last main-conv bias: out = h3 + Wr x + br
    b_all = b_all.at[2, K:K + dim_out, 0].add(params["res_b"])
    res_w = jnp.pad(params["res_w"], ((0, CH - dim_out), (0, CH - dim_in)))
    return w_off, w_main, b_all, res_w


def resblock_pallas(x, params, kernel_size, *, target_lanes=512):
    B, dim_in, L = x.shape
    K = kernel_size
    pad = K // 2
    dim_out = params["w1"].shape[0]
    CH = _round_up(max(dim_in, dim_out), 8)       # padded channel rows (sublanes)

    # batches per block: largest divisor of B within the lane-density cap, so
    # no padded (dummy) sequences are ever processed; prefer >= 2 grid steps
    # so v7x's two TensorCores both get work via the "parallel" grid axis.
    bb_cap = max(1, target_lanes // max(L, 1))
    divs = [d for d in range(1, B + 1) if B % d == 0 and d <= bb_cap]
    pref = [d for d in divs if B // d >= 2]
    BB = max(pref) if pref else max(divs)
    G = B // BB
    N = BB * L

    # ---- layout plumbing: (B, C, L) -> (G, CH, BB*L); each block covers the
    #      full trailing dims, so the (8,128) BlockSpec rule holds for any L.
    xp = jnp.pad(x.astype(jnp.float32), ((0, 0), (0, CH - dim_in), (0, 0)))
    x3 = xp.reshape(G, BB, CH, L).transpose(0, 2, 1, 3).reshape(G, CH, N)

    # grid-invariant static-conv edge masks, precomputed once wrapper-side.
    n_loc = jnp.arange(N) % L
    tapm = jnp.stack(
        [((n_loc + (t - pad) >= 0) & (n_loc + (t - pad) < L)).astype(jnp.float32)
         for t in range(K)], axis=0)                                  # (K, N)

    w_off, w_main, b_all, res_w = _pack_params(params, dim_in, dim_out, K, CH)

    in_specs = [
        pl.BlockSpec((None, CH, N), lambda g: (g, 0, 0)),             # x slab
        pl.BlockSpec(tapm.shape, lambda g: (0, 0)),                   # edge masks
        pl.BlockSpec(w_off.shape, lambda g: (0, 0, 0)),
        pl.BlockSpec(w_main.shape, lambda g: (0, 0, 0)),
        pl.BlockSpec(b_all.shape, lambda g: (0, 0, 0)),
        pl.BlockSpec(res_w.shape, lambda g: (0, 0)),
    ]
    kernel = functools.partial(_resblock_kernel, K=K, L=L, BB=BB, CH=CH, pad=pad)
    out3 = pl.pallas_call(
        kernel,
        out_shape=jax.ShapeDtypeStruct((G, CH, N), jnp.float32),
        grid_spec=pltpu.PrefetchScalarGridSpec(
            num_scalar_prefetch=0,
            grid=(G,),
            in_specs=in_specs,
            out_specs=pl.BlockSpec((None, CH, N), lambda g: (g, 0, 0)),
            scratch_shapes=[pltpu.VMEM((K * L, L), jnp.float32)],     # reused S buffer
        ),
        compiler_params=pltpu.CompilerParams(
            dimension_semantics=("parallel",),
            vmem_limit_bytes=32 * 1024 * 1024,
        ),
    )(x3, tapm, w_off, w_main, b_all, res_w)

    # undo the layout plumbing: (G, CH, BB*L) -> (B, dim_out, L)
    out = out3.reshape(G, CH, BB, L).transpose(0, 2, 1, 3).reshape(B, CH, L)
    return out[:, :dim_out, :]


# ----------------------------------------------------------------------------
# Pure-JAX f32 reference (same math, batched with vmap) for the self-check.
# ----------------------------------------------------------------------------
def _deformable_jax(x, off_w, off_b, w, b, pad):
    C_in, L = x.shape
    K = off_w.shape[0]
    xp = jnp.pad(x, ((0, 0), (pad, pad)))
    taps = jnp.stack([xp[:, t:t + L] for t in range(K)], axis=-1)       # (C_in, L, K)
    off = jnp.einsum("kct,clt->kl", off_w, taps) + off_b[:, None]       # (K, L)
    l = jnp.arange(L, dtype=jnp.float32)
    ks = jnp.arange(K, dtype=jnp.float32)
    pos = l[None, :] + ks[:, None] - pad + off                          # (K, L)
    j = jnp.arange(L, dtype=jnp.float32)
    S = jnp.maximum(0.0, 1.0 - jnp.abs(pos[:, :, None] - j[None, None, :]))
    samp = jnp.einsum("cj,klj->ckl", x, S)                              # (C_in, K, L)
    return jnp.einsum("ock,ckl->ol", w, samp) + b[:, None]


def resblock_reference(x, params, kernel_size):
    pad = kernel_size // 2

    def one(xb):
        h = _deformable_jax(xb, params["off_w1"], params["off_b1"],
                            params["w1"], params["b1"], pad)
        h = _deformable_jax(h, params["off_w2"], params["off_b2"],
                            params["w2"], params["b2"], pad)
        h = _deformable_jax(h, params["off_w3"], params["off_b3"],
                            params["w3"], params["b3"], pad)
        return h + (params["res_w"] @ xb + params["res_b"][:, None])

    return jax.vmap(one)(x)


# ----------------------------------------------------------------------------
# Deterministic parameter init (synthetic; matches the __init__ shapes).
# ----------------------------------------------------------------------------
def init_params(key, dim_in, dim_out, K):
    ks = jax.random.split(key, 14)

    def n(k, shape, scale):
        return (scale * jax.random.normal(k, shape)).astype(jnp.float32)

    p = {}
    dims = [(dim_in, dim_out), (dim_out, dim_out), (dim_out, dim_out)]
    i = 0
    for li, (ci, co) in enumerate(dims, start=1):
        p[f"off_w{li}"] = n(ks[i], (K, ci, K), 0.05); i += 1
        p[f"off_b{li}"] = n(ks[i], (K,), 0.02); i += 1
        p[f"w{li}"] = n(ks[i], (co, ci, K), 0.2); i += 1
        p[f"b{li}"] = n(ks[i], (co,), 0.05); i += 1
    if dim_in != dim_out:
        p["res_w"] = n(ks[i], (dim_out, dim_in), 0.3); i += 1
        p["res_b"] = n(ks[i], (dim_out,), 0.05); i += 1
    else:  # self.res is None  ->  out += x  (identity "conv", zero bias)
        p["res_w"] = jnp.eye(dim_out, dtype=jnp.float32)
        p["res_b"] = jnp.zeros((dim_out,), jnp.float32)
    return p


if __name__ == "__main__":
    B, dim_in, dim_out, K, L = 2, 4, 8, 3, 16   # sequence_in = L = 16

    key = jax.random.PRNGKey(0)
    kp, kx = jax.random.split(key)
    params = init_params(kp, dim_in, dim_out, K)
    x = jax.random.normal(kx, (B, dim_in, L), dtype=jnp.float32)

    out = resblock_pallas(x, params, K)
    out = jax.block_until_ready(out)

    ref = resblock_reference(x, params, K)
    assert out.shape == (B, dim_out, L)
    rel_err = float(jnp.linalg.norm(out - ref) / (jnp.linalg.norm(ref) + 1e-12))
    max_err = float(jnp.max(jnp.abs(out - ref)))
    assert rel_err < 2e-2, f"rel L2 err = {rel_err:.5f}, max abs err = {max_err:.5f}"

    print("KERNEL_OK")
</pallas_src>

<mosaic_0001>
module attributes {stable_mosaic.version = 11 : i64} {
  func.func @_resblock_kernel(%arg0: i32, %arg1: memref<1x8x16xf32, #tpu.memory_space<vmem>>, %arg2: memref<3x16xf32, #tpu.memory_space<vmem>>, %arg3: memref<3x3x24xf32, #tpu.memory_space<vmem>>, %arg4: memref<3x24x8xf32, #tpu.memory_space<vmem>>, %arg5: memref<3x11x1xf32, #tpu.memory_space<vmem>>, %arg6: memref<8x8xf32, #tpu.memory_space<vmem>>, %arg7: memref<1x8x16xf32, #tpu.memory_space<vmem>>, %arg8: memref<48x16xf32, #tpu.memory_space<vmem>>) attributes {dimension_semantics = [#tpu.dimension_semantics<parallel>], iteration_bounds = array<i64: 2>, scalar_prefetch = 0 : i64, scratch_operands = 1 : i64, tpu.core_type = #tpu.core_type<tc>, window_params = [{transform_indices = @transform_0, window_bounds = array<i64: 1, 8, 16>}, {pipeline_mode = #tpu.pipeline_mode<synchronous>, transform_indices = @transform_1, window_bounds = array<i64: 3, 16>}, {pipeline_mode = #tpu.pipeline_mode<synchronous>, transform_indices = @transform_2, window_bounds = array<i64: 3, 3, 24>}, {pipeline_mode = #tpu.pipeline_mode<synchronous>, transform_indices = @transform_3, window_bounds = array<i64: 3, 24, 8>}, {pipeline_mode = #tpu.pipeline_mode<synchronous>, transform_indices = @transform_4, window_bounds = array<i64: 3, 11, 1>}, {pipeline_mode = #tpu.pipeline_mode<synchronous>, transform_indices = @transform_5, window_bounds = array<i64: 8, 8>}, {transform_indices = @transform_6, window_bounds = array<i64: 1, 8, 16>}]} {
    %0 = tpu.iota {dimensions = array<i32: 0>} : vector<16x1xi32>
    %1 = arith.sitofp %0 : vector<16x1xi32> to vector<16x1xf32>
    %2 = tpu.iota {dimensions = array<i32: 1>} : vector<1x16xi32>
    %3 = arith.sitofp %2 : vector<1x16xi32> to vector<1x16xf32>
    %c0 = arith.constant 0 : index
    %c0_0 = arith.constant 0 : index
    %4 = vector.load %arg2[%c0, %c0_0] : memref<3x16xf32, #tpu.memory_space<vmem>>, vector<3x16xf32>
    %c0_1 = arith.constant 0 : index
    %c0_2 = arith.constant 0 : index
    %c0_3 = arith.constant 0 : index
    %5 = vector.load %arg1[%c0_1, %c0_2, %c0_3] : memref<1x8x16xf32, #tpu.memory_space<vmem>>, vector<1x8x16xf32>
    %6 = vector.shape_cast %5 : vector<1x8x16xf32> to vector<8x16xf32>
    %c0_4 = arith.constant 0 : index
    %c0_5 = arith.constant 0 : index
    %c0_6 = arith.constant 0 : index
    %7 = vector.load %arg5[%c0_4, %c0_5, %c0_6] : memref<3x11x1xf32, #tpu.memory_space<vmem>>, vector<1x11x1xf32>
    %8 = vector.shape_cast %7 : vector<1x11x1xf32> to vector<11x1xf32>
    %c0_7 = arith.constant 0 : index
    %c0_8 = arith.constant 0 : index
    %c0_9 = arith.constant 0 : index
    %9 = vector.load %arg3[%c0_7, %c0_8, %c0_9] : memref<3x3x24xf32, #tpu.memory_space<vmem>>, vector<1x3x24xf32>
    %10 = vector.shape_cast %9 : vector<1x3x24xf32> to vector<3x24xf32>
    %11 = vector.extract_strided_slice %8 {offsets = [0, 0], sizes = [3, 1], strides = [1, 1]} : vector<11x1xf32> to vector<3x1xf32>
    %c0_10 = arith.constant 0 : index
    %c0_11 = arith.constant 0 : index
    %c0_12 = arith.constant 0 : index
    %12 = vector.load %arg4[%c0_10, %c0_11, %c0_12] : memref<3x24x8xf32, #tpu.memory_space<vmem>>, vector<1x24x8xf32>
    %13 = vector.shape_cast %12 : vector<1x24x8xf32> to vector<24x8xf32>
    %14 = vector.extract_strided_slice %8 {offsets = [3, 0], sizes = [8, 1], strides = [1, 1]} : vector<11x1xf32> to vector<8x1xf32>
    %cst = arith.constant 0.000000e+00 : f32
    %15 = vector.broadcast %cst : f32 to vector<3x16xf32>
    %16 = vector.extract_strided_slice %10 {offsets = [0, 0], sizes = [3, 8], strides = [1, 1]} : vector<3x24xf32> to vector<3x8xf32>
    %cst_13 = arith.constant dense<0.000000e+00> : vector<3x16xf32>
    %17 = tpu.matmul %16, %6, %cst_13 {dimension_numbers = #tpu.dot_dimension_numbers<[1], [0], [0], [1], [0, 0, 1, 1], [], []>} : vector<3x8xf32>, vector<8x16xf32>, vector<3x16xf32> -> vector<3x16xf32>
    %cst_14 = arith.constant 0.000000e+00 : f32
    %18 = vector.broadcast %cst_14 : f32 to vector<3x1xf32>
    %19 = vector.extract_strided_slice %17 {offsets = [0, 0], sizes = [3, 15], strides = [1, 1]} : vector<3x16xf32> to vector<3x15xf32>
    %20 = tpu.concatenate %18, %19 in 1 : vector<3x1xf32>, vector<3x15xf32> -> vector<3x16xf32>
    %21 = vector.extract_strided_slice %4 {offsets = [0, 0], sizes = [1, 16], strides = [1, 1]} : vector<3x16xf32> to vector<1x16xf32>
    %22 = vector.broadcast %21 : vector<1x16xf32> to vector<3x16xf32>
    %23 = arith.mulf %20, %22 : vector<3x16xf32>
    %24 = arith.addf %15, %23 : vector<3x16xf32>
    %25 = vector.extract_strided_slice %10 {offsets = [0, 8], sizes = [3, 8], strides = [1, 1]} : vector<3x24xf32> to vector<3x8xf32>
    %cst_15 = arith.constant dense<0.000000e+00> : vector<3x16xf32>
    %26 = tpu.matmul %25, %6, %cst_15 {dimension_numbers = #tpu.dot_dimension_numbers<[1], [0], [0], [1], [0, 0, 1, 1], [], []>} : vector<3x8xf32>, vector<8x16xf32>, vector<3x16xf32> -> vector<3x16xf32>
    %27 = vector.extract_strided_slice %4 {offsets = [1, 0], sizes = [1, 16], strides = [1, 1]} : vector<3x16xf32> to vector<1x16xf32>
    %28 = vector.broadcast %27 : vector<1x16xf32> to vector<3x16xf32>
    %29 = arith.mulf %26, %28 : vector<3x16xf32>
    %30 = arith.addf %24, %29 : vector<3x16xf32>
    %31 = vector.extract_strided_slice %10 {offsets = [0, 16], sizes = [3, 8], strides = [1, 1]} : vector<3x24xf32> to vector<3x8xf32>
    %cst_16 = arith.constant dense<0.000000e+00> : vector<3x16xf32>
    %32 = tpu.matmul %31, %6, %cst_16 {dimension_numbers = #tpu.dot_dimension_numbers<[1], [0], [0], [1], [0, 0, 1, 1], [], []>} : vector<3x8xf32>, vector<8x16xf32>, vector<3x16xf32> -> vector<3x16xf32>
    %cst_17 = arith.constant 0.000000e+00 : f32
    %33 = vector.broadcast %cst_17 : f32 to vector<3x1xf32>
    %34 = vector.extract_strided_slice %32 {offsets = [0, 1], sizes = [3, 15], strides = [1, 1]} : vector<3x16xf32> to vector<3x15xf32>
    %35 = tpu.concatenate %34, %33 in 1 : vector<3x15xf32>, vector<3x1xf32> -> vector<3x16xf32>
    %36 = vector.extract_strided_slice %4 {offsets = [2, 0], sizes = [1, 16], strides = [1, 1]} : vector<3x16xf32> to vector<1x16xf32>
    %37 = vector.broadcast %36 : vector<1x16xf32> to vector<3x16xf32>
    %38 = arith.mulf %35, %37 : vector<3x16xf32>
    %39 = arith.addf %30, %38 : vector<3x16xf32>
    %40 = vector.broadcast %11 : vector<3x1xf32> to vector<3x16xf32>
    %41 = arith.addf %39, %40 : vector<3x16xf32>
    %42 = vector.extract_strided_slice %13 {offsets = [0, 0], sizes = [8, 8], strides = [1, 1]} : vector<24x8xf32> to vector<8x8xf32>
    %cst_18 = arith.constant dense<0.000000e+00> : vector<8x16xf32>
    %43 = tpu.matmul %42, %6, %cst_18 {dimension_numbers = #tpu.dot_dimension_numbers<[1], [0], [0], [1], [0, 0, 1, 1], [], []>} : vector<8x8xf32>, vector<8x16xf32>, vector<8x16xf32> -> vector<8x16xf32>
    %44 = vector.extract_strided_slice %13 {offsets = [8, 0], sizes = [8, 8], strides = [1, 1]} : vector<24x8xf32> to vector<8x8xf32>
    %cst_19 = arith.constant dense<0.000000e+00> : vector<8x16xf32>
    %45 = tpu.matmul %44, %6, %cst_19 {dimension_numbers = #tpu.dot_dimension_numbers<[1], [0], [0], [1], [0, 0, 1, 1], [], []>} : vector<8x8xf32>, vector<8x16xf32>, vector<8x16xf32> -> vector<8x16xf32>
    %46 = vector.extract_strided_slice %13 {offsets = [16, 0], sizes = [8, 8], strides = [1, 1]} : vector<24x8xf32> to vector<8x8xf32>
    %cst_20 = arith.constant dense<0.000000e+00> : vector<8x16xf32>
    %47 = tpu.matmul %46, %6, %cst_20 {dimension_numbers = #tpu.dot_dimension_numbers<[1], [0], [0], [1], [0, 0, 1, 1], [], []>} : vector<8x8xf32>, vector<8x16xf32>, vector<8x16xf32> -> vector<8x16xf32>
    %cst_21 = arith.constant -1.000000e+00 : f32
    %48 = vector.broadcast %cst_21 : f32 to vector<1x16xf32>
    %49 = arith.addf %3, %48 : vector<1x16xf32>
    %50 = vector.extract_strided_slice %41 {offsets = [0, 0], sizes = [1, 16], strides = [1, 1]} : vector<3x16xf32> to vector<1x16xf32>
    %51 = arith.addf %49, %50 : vector<1x16xf32>
    %52 = vector.broadcast %51 : vector<1x16xf32> to vector<16x16xf32>
    %53 = vector.broadcast %1 : vector<16x1xf32> to vector<16x16xf32>
    %54 = arith.subf %52, %53 : vector<16x16xf32>
    %55 = math.absf %54 : vector<16x16xf32>
    %cst_22 = arith.constant 1.000000e+00 : f32
    %56 = vector.broadcast %cst_22 : f32 to vector<16x16xf32>
    %57 = arith.subf %56, %55 : vector<16x16xf32>
    %cst_23 = arith.constant 0.000000e+00 : f32
    %58 = vector.broadcast %cst_23 : f32 to vector<16x16xf32>
    %59 = arith.maximumf %58, %57 : vector<16x16xf32>
    %c0_24 = arith.constant 0 : index
    %c0_25 = arith.constant 0 : index
    %60 = vector.load %arg8[%c0_24, %c0_25] : memref<48x16xf32, #tpu.memory_space<vmem>>, vector<16x16xf32>
    tpu.vector_store %arg8[%c0_24, %c0_25], %59 {strides = array<i32>} : memref<48x16xf32, #tpu.memory_space<vmem>>, vector<16x16xf32>,
    %cst_26 = arith.constant 0.000000e+00 : f32
    %61 = vector.broadcast %cst_26 : f32 to vector<1x16xf32>
    %62 = arith.addf %3, %61 : vector<1x16xf32>
    %63 = vector.extract_strided_slice %41 {offsets = [1, 0], sizes = [1, 16], strides = [1, 1]} : vector<3x16xf32> to vector<1x16xf32>
    %64 = arith.addf %62, %63 : vector<1x16xf32>
    %65 = vector.broadcast %64 : vector<1x16xf32> to vector<16x16xf32>
    %66 = vector.broadcast %1 : vector<16x1xf32> to vector<16x16xf32>
    %67 = arith.subf %65, %66 : vector<16x16xf32>
    %68 = math.absf %67 : vector<16x16xf32>
    %cst_27 = arith.constant 1.000000e+00 : f32
    %69 = vector.broadcast %cst_27 : f32 to vector<16x16xf32>
    %70 = arith.subf %69, %68 : vector<16x16xf32>
    %cst_28 = arith.constant 0.000000e+00 : f32
    %71 = vector.broadcast %cst_28 : f32 to vector<16x16xf32>
    %72 = arith.maximumf %71, %70 : vector<16x16xf32>
    %c16 = arith.constant 16 : index
    %c0_29 = arith.constant 0 : index
    %73 = vector.load %arg8[%c16, %c0_29] : memref<48x16xf32, #tpu.memory_space<vmem>>, vector<16x16xf32>
    tpu.vector_store %arg8[%c16, %c0_29], %72 {strides = array<i32>} : memref<48x16xf32, #tpu.memory_space<vmem>>, vector<16x16xf32>,
    %cst_30 = arith.constant 1.000000e+00 : f32
    %74 = vector.broadcast %cst_30 : f32 to vector<1x16xf32>
    %75 = arith.addf %3, %74 : vector<1x16xf32>
    %76 = vector.extract_strided_slice %41 {offsets = [2, 0], sizes = [1, 16], strides = [1, 1]} : vector<3x16xf32> to vector<1x16xf32>
    %77 = arith.addf %75, %76 : vector<1x16xf32>
    %78 = vector.broadcast %77 : vector<1x16xf32> to vector<16x16xf32>
    %79 = vector.broadcast %1 : vector<16x1xf32> to vector<16x16xf32>
    %80 = arith.subf %78, %79 : vector<16x16xf32>
    %81 = math.absf %80 : vector<16x16xf32>
    %cst_31 = arith.constant 1.000000e+00 : f32
    %82 = vector.broadcast %cst_31 : f32 to vector<16x16xf32>
    %83 = arith.subf %82, %81 : vector<16x16xf32>
    %cst_32 = arith.constant 0.000000e+00 : f32
    %84 = vector.broadcast %cst_32 : f32 to vector<16x16xf32>
    %85 = arith.maximumf %84, %83 : vector<16x16xf32>
    %c32 = arith.constant 32 : index
    %c0_33 = arith.constant 0 : index
    %86 = vector.load %arg8[%c32, %c0_33] : memref<48x16xf32, #tpu.memory_space<vmem>>, vector<16x16xf32>
    tpu.vector_store %arg8[%c32, %c0_33], %85 {strides = array<i32>} : memref<48x16xf32, #tpu.memory_space<vmem>>, vector<16x16xf32>,
    %87 = tpu.concatenate %43, %45, %47 in 1 : vector<8x16xf32>, vector<8x16xf32>, vector<8x16xf32> -> vector<8x48xf32>
    %c0_34 = arith.constant 0 : index
    %c0_35 = arith.constant 0 : index
    %88 = vector.load %arg8[%c0_34, %c0_35] : memref<48x16xf32, #tpu.memory_space<vmem>>, vector<48x16xf32>
    %cst_36 = arith.constant dense<0.000000e+00> : vector<8x16xf32>
    %89 = tpu.matmul %87, %88, %cst_36 {dimension_numbers = #tpu.dot_dimension_numbers<[1], [0], [0], [1], [0, 0, 1, 1], [], []>} : vector<8x48xf32>, vector<48x16xf32>, vector<8x16xf32> -> vector<8x16xf32>
    %90 = vector.broadcast %14 : vector<8x1xf32> to vector<8x16xf32>
    %91 = arith.addf %89, %90 : vector<8x16xf32>
    %c1 = arith.constant 1 : index
    %c0_37 = arith.constant 0 : index
    %c0_38 = arith.constant 0 : index
    %92 = vector.load %arg5[%c1, %c0_37, %c0_38] : memref<3x11x1xf32, #tpu.memory_space<vmem>>, vector<1x11x1xf32>
    %93 = vector.shape_cast %92 : vector<1x11x1xf32> to vector<11x1xf32>
    %c1_39 = arith.constant 1 : index
    %c0_40 = arith.constant 0 : index
    %c0_41 = arith.constant 0 : index
    %94 = vector.load %arg3[%c1_39, %c0_40, %c0_41] : memref<3x3x24xf32, #tpu.memory_space<vmem>>, vector<1x3x24xf32>
    %95 = vector.shape_cast %94 : vector<1x3x24xf32> to vector<3x24xf32>
    %96 = vector.extract_strided_slice %93 {offsets = [0, 0], sizes = [3, 1], strides = [1, 1]} : vector<11x1xf32> to vector<3x1xf32>
    %c1_42 = arith.constant 1 : index
    %c0_43 = arith.constant 0 : index
    %c0_44 = arith.constant 0 : index
    %97 = vector.load %arg4[%c1_42, %c0_43, %c0_44] : memref<3x24x8xf32, #tpu.memory_space<vmem>>, vector<1x24x8xf32>
    %98 = vector.shape_cast %97 : vector<1x24x8xf32> to vector<24x8xf32>
    %99 = vector.extract_strided_slice %93 {offsets = [3, 0], sizes = [8, 1], strides = [1, 1]} : vector<11x1xf32> to vector<8x1xf32>
    %cst_45 = arith.constant 0.000000e+00 : f32
    %100 = vector.broadcast %cst_45 : f32 to vector<3x16xf32>
    %101 = vector.extract_strided_slice %95 {offsets = [0, 0], sizes = [3, 8], strides = [1, 1]} : vector<3x24xf32> to vector<3x8xf32>
    %cst_46 = arith.constant dense<0.000000e+00> : vector<3x16xf32>
    %102 = tpu.matmul %101, %91, %cst_46 {dimension_numbers = #tpu.dot_dimension_numbers<[1], [0], [0], [1], [0, 0, 1, 1], [], []>} : vector<3x8xf32>, vector<8x16xf32>, vector<3x16xf32> -> vector<3x16xf32>
    %cst_47 = arith.constant 0.000000e+00 : f32
    %103 = vector.broadcast %cst_47 : f32 to vector<3x1xf32>
    %104 = vector.extract_strided_slice %102 {offsets = [0, 0], sizes = [3, 15], strides = [1, 1]} : vector<3x16xf32> to vector<3x15xf32>
    %105 = tpu.concatenate %103, %104 in 1 : vector<3x1xf32>, vector<3x15xf32> -> vector<3x16xf32>
    %106 = vector.extract_strided_slice %4 {offsets = [0, 0], sizes = [1, 16], strides = [1, 1]} : vector<3x16xf32> to vector<1x16xf32>
    %107 = vector.broadcast %106 : vector<1x16xf32> to vector<3x16xf32>
    %108 = arith.mulf %105, %107 : vector<3x16xf32>
    %109 = arith.addf %100, %108 : vector<3x16xf32>
    %110 = vector.extract_strided_slice %95 {offsets = [0, 8], sizes = [3, 8], strides = [1, 1]} : vector<3x24xf32> to vector<3x8xf32>
    %cst_48 = arith.constant dense<0.000000e+00> : vector<3x16xf32>
    %111 = tpu.matmul %110, %91, %cst_48 {dimension_numbers = #tpu.dot_dimension_numbers<[1], [0], [0], [1], [0, 0, 1, 1], [], []>} : vector<3x8xf32>, vector<8x16xf32>, vector<3x16xf32> -> vector<3x16xf32>
    %112 = vector.extract_strided_slice %4 {offsets = [1, 0], sizes = [1, 16], strides = [1, 1]} : vector<3x16xf32> to vector<1x16xf32>
    %113 = vector.broadcast %112 : vector<1x16xf32> to vector<3x16xf32>
    %114 = arith.mulf %111, %113 : vector<3x16xf32>
    %115 = arith.addf %109, %114 : vector<3x16xf32>
    %116 = vector.extract_strided_slice %95 {offsets = [0, 16], sizes = [3, 8], strides = [1, 1]} : vector<3x24xf32> to vector<3x8xf32>
    %cst_49 = arith.constant dense<0.000000e+00> : vector<3x16xf32>
    %117 = tpu.matmul %116, %91, %cst_49 {dimension_numbers = #tpu.dot_dimension_numbers<[1], [0], [0], [1], [0, 0, 1, 1], [], []>} : vector<3x8xf32>, vector<8x16xf32>, vector<3x16xf32> -> vector<3x16xf32>
    %cst_50 = arith.constant 0.000000e+00 : f32
    %118 = vector.broadcast %cst_50 : f32 to vector<3x1xf32>
    %119 = vector.extract_strided_slice %117 {offsets = [0, 1], sizes = [3, 15], strides = [1, 1]} : vector<3x16xf32> to vector<3x15xf32>
    %120 = tpu.concatenate %119, %118 in 1 : vector<3x15xf32>, vector<3x1xf32> -> vector<3x16xf32>
    %121 = vector.extract_strided_slice %4 {offsets = [2, 0], sizes = [1, 16], strides = [1, 1]} : vector<3x16xf32> to vector<1x16xf32>
    %122 = vector.broadcast %121 : vector<1x16xf32> to vector<3x16xf32>
    %123 = arith.mulf %120, %122 : vector<3x16xf32>
    %124 = arith.addf %115, %123 : vector<3x16xf32>
    %125 = vector.broadcast %96 : vector<3x1xf32> to vector<3x16xf32>
    %126 = arith.addf %124, %125 : vector<3x16xf32>
    %127 = vector.extract_strided_slice %98 {offsets = [0, 0], sizes = [8, 8], strides = [1, 1]} : vector<24x8xf32> to vector<8x8xf32>
    %cst_51 = arith.constant dense<0.000000e+00> : vector<8x16xf32>
    %128 = tpu.matmul %127, %91, %cst_51 {dimension_numbers = #tpu.dot_dimension_numbers<[1], [0], [0], [1], [0, 0, 1, 1], [], []>} : vector<8x8xf32>, vector<8x16xf32>, vector<8x16xf32> -> vector<8x16xf32>
    %129 = vector.extract_strided_slice %98 {offsets = [8, 0], sizes = [8, 8], strides = [1, 1]} : vector<24x8xf32> to vector<8x8xf32>
    %cst_52 = arith.constant dense<0.000000e+00> : vector<8x16xf32>
    %130 = tpu.matmul %129, %91, %cst_52 {dimension_numbers = #tpu.dot_dimension_numbers<[1], [0], [0], [1], [0, 0, 1, 1], [], []>} : vector<8x8xf32>, vector<8x16xf32>, vector<8x16xf32> -> vector<8x16xf32>
    %131 = vector.extract_strided_slice %98 {offsets = [16, 0], sizes = [8, 8], strides = [1, 1]} : vector<24x8xf32> to vector<8x8xf32>
    %cst_53 = arith.constant dense<0.000000e+00> : vector<8x16xf32>
    %132 = tpu.matmul %131, %91, %cst_53 {dimension_numbers = #tpu.dot_dimension_numbers<[1], [0], [0], [1], [0, 0, 1, 1], [], []>} : vector<8x8xf32>, vector<8x16xf32>, vector<8x16xf32> -> vector<8x16xf32>
    %cst_54 = arith.constant -1.000000e+00 : f32
    %133 = vector.broadcast %cst_54 : f32 to vector<1x16xf32>
    %134 = arith.addf %3, %133 : vector<1x16xf32>
    %135 = vector.extract_strided_slice %126 {offsets = [0, 0], sizes = [1, 16], strides = [1, 1]} : vector<3x16xf32> to vector<1x16xf32>
    %136 = arith.addf %134, %135 : vector<1x16xf32>
    %137 = vector.broadcast %136 : vector<1x16xf32> to vector<16x16xf32>
    %138 = vector.broadcast %1 : vector<16x1xf32> to vector<16x16xf32>
    %139 = arith.subf %137, %138 : vector<16x16xf32>
    %140 = math.absf %139 : vector<16x16xf32>
    %cst_55 = arith.constant 1.000000e+00 : f32
    %141 = vector.broadcast %cst_55 : f32 to vector<16x16xf32>
    %142 = arith.subf %141, %140 : vector<16x16xf32>
    %cst_56 = arith.constant 0.000000e+00 : f32
    %143 = vector.broadcast %cst_56 : f32 to vector<16x16xf32>
    %144 = arith.maximumf %143, %142 : vector<16x16xf32>
    %c0_57 = arith.constant 0 : index
    %c0_58 = arith.constant 0 : index
    %145 = vector.load %arg8[%c0_57, %c0_58] : memref<48x16xf32, #tpu.memory_space<vmem>>, vector<16x16xf32>
    tpu.vector_store %arg8[%c0_57, %c0_58], %144 {strides = array<i32>} : memref<48x16xf32, #tpu.memory_space<vmem>>, vector<16x16xf32>,
    %cst_59 = arith.constant 0.000000e+00 : f32
    %146 = vector.broadcast %cst_59 : f32 to vector<1x16xf32>
    %147 = arith.addf %3, %146 : vector<1x16xf32>
    %148 = vector.extract_strided_slice %126 {offsets = [1, 0], sizes = [1, 16], strides = [1, 1]} : vector<3x16xf32> to vector<1x16xf32>
    %149 = arith.addf %147, %148 : vector<1x16xf32>
    %150 = vector.broadcast %149 : vector<1x16xf32> to vector<16x16xf32>
    %151 = vector.broadcast %1 : vector<16x1xf32> to vector<16x16xf32>
    %152 = arith.subf %150, %151 : vector<16x16xf32>
    %153 = math.absf %152 : vector<16x16xf32>
    %cst_60 = arith.constant 1.000000e+00 : f32
    %154 = vector.broadcast %cst_60 : f32 to vector<16x16xf32>
    %155 = arith.subf %154, %153 : vector<16x16xf32>
    %cst_61 = arith.constant 0.000000e+00 : f32
    %156 = vector.broadcast %cst_61 : f32 to vector<16x16xf32>
    %157 = arith.maximumf %156, %155 : vector<16x16xf32>
    %c16_62 = arith.constant 16 : index
    %c0_63 = arith.constant 0 : index
    %158 = vector.load %arg8[%c16_62, %c0_63] : memref<48x16xf32, #tpu.memory_space<vmem>>, vector<16x16xf32>
    tpu.vector_store %arg8[%c16_62, %c0_63], %157 {strides = array<i32>} : memref<48x16xf32, #tpu.memory_space<vmem>>, vector<16x16xf32>,
    %cst_64 = arith.constant 1.000000e+00 : f32
    %159 = vector.broadcast %cst_64 : f32 to vector<1x16xf32>
    %160 = arith.addf %3, %159 : vector<1x16xf32>
    %161 = vector.extract_strided_slice %126 {offsets = [2, 0], sizes = [1, 16], strides = [1, 1]} : vector<3x16xf32> to vector<1x16xf32>
    %162 = arith.addf %160, %161 : vector<1x16xf32>
    %163 = vector.broadcast %162 : vector<1x16xf32> to vector<16x16xf32>
    %164 = vector.broadcast %1 : vector<16x1xf32> to vector<16x16xf32>
    %165 = arith.subf %163, %164 : vector<16x16xf32>
    %166 = math.absf %165 : vector<16x16xf32>
    %cst_65 = arith.constant 1.000000e+00 : f32
    %167 = vector.broadcast %cst_65 : f32 to vector<16x16xf32>
    %168 = arith.subf %167, %166 : vector<16x16xf32>
    %cst_66 = arith.constant 0.000000e+00 : f32
    %169 = vector.broadcast %cst_66 : f32 to vector<16x16xf32>
    %170 = arith.maximumf %169, %168 : vector<16x16xf32>
    %c32_67 = arith.constant 32 : index
    %c0_68 = arith.constant 0 : index
    %171 = vector.load %arg8[%c32_67, %c0_68] : memref<48x16xf32, #tpu.memory_space<vmem>>, vector<16x16xf32>
    tpu.vector_store %arg8[%c32_67, %c0_68], %170 {strides = array<i32>} : memref<48x16xf32, #tpu.memory_space<vmem>>, vector<16x16xf32>,
    %172 = tpu.concatenate %128, %130, %132 in 1 : vector<8x16xf32>, vector<8x16xf32>, vector<8x16xf32> -> vector<8x48xf32>
    %c0_69 = arith.constant 0 : index
    %c0_70 = arith.constant 0 : index
    %173 = vector.load %arg8[%c0_69, %c0_70] : memref<48x16xf32, #tpu.memory_space<vmem>>, vector<48x16xf32>
    %cst_71 = arith.constant dense<0.000000e+00> : vector<8x16xf32>
    %174 = tpu.matmul %172, %173, %cst_71 {dimension_numbers = #tpu.dot_dimension_numbers<[1], [0], [0], [1], [0, 0, 1, 1], [], []>} : vector<8x48xf32>, vector<48x16xf32>, vector<8x16xf32> -> vector<8x16xf32>
    %175 = vector.broadcast %99 : vector<8x1xf32> to vector<8x16xf32>
    %176 = arith.addf %174, %175 : vector<8x16xf32>
    %c2 = arith.constant 2 : index
    %c0_72 = arith.constant 0 : index
    %c0_73 = arith.constant 0 : index
    %177 = vector.load %arg5[%c2, %c0_72, %c0_73] : memref<3x11x1xf32, #tpu.memory_space<vmem>>, vector<1x11x1xf32>
    %178 = vector.shape_cast %177 : vector<1x11x1xf32> to vector<11x1xf32>
    %c2_74 = arith.constant 2 : index
    %c0_75 = arith.constant 0 : index
    %c0_76 = arith.constant 0 : index
    %179 = vector.load %arg3[%c2_74, %c0_75, %c0_76] : memref<3x3x24xf32, #tpu.memory_space<vmem>>, vector<1x3x24xf32>
    %180 = vector.shape_cast %179 : vector<1x3x24xf32> to vector<3x24xf32>
    %181 = vector.extract_strided_slice %178 {offsets = [0, 0], sizes = [3, 1], strides = [1, 1]} : vector<11x1xf32> to vector<3x1xf32>
    %c2_77 = arith.constant 2 : index
    %c0_78 = arith.constant 0 : index
    %c0_79 = arith.constant 0 : index
    %182 = vector.load %arg4[%c2_77, %c0_78, %c0_79] : memref<3x24x8xf32, #tpu.memory_space<vmem>>, vector<1x24x8xf32>
    %183 = vector.shape_cast %182 : vector<1x24x8xf32> to vector<24x8xf32>
    %184 = vector.extract_strided_slice %178 {offsets = [3, 0], sizes = [8, 1], strides = [1, 1]} : vector<11x1xf32> to vector<8x1xf32>
    %cst_80 = arith.constant 0.000000e+00 : f32
    %185 = vector.broadcast %cst_80 : f32 to vector<3x16xf32>
    %186 = vector.extract_strided_slice %180 {offsets = [0, 0], sizes = [3, 8], strides = [1, 1]} : vector<3x24xf32> to vector<3x8xf32>
    %cst_81 = arith.constant dense<0.000000e+00> : vector<3x16xf32>
    %187 = tpu.matmul %186, %176, %cst_81 {dimension_numbers = #tpu.dot_dimension_numbers<[1], [0], [0], [1], [0, 0, 1, 1], [], []>} : vector<3x8xf32>, vector<8x16xf32>, vector<3x16xf32> -> vector<3x16xf32>
    %cst_82 = arith.constant 0.000000e+00 : f32
    %188 = vector.broadcast %cst_82 : f32 to vector<3x1xf32>
    %189 = vector.extract_strided_slice %187 {offsets = [0, 0], sizes = [3, 15], strides = [1, 1]} : vector<3x16xf32> to vector<3x15xf32>
    %190 = tpu.concatenate %188, %189 in 1 : vector<3x1xf32>, vector<3x15xf32> -> vector<3x16xf32>
    %191 = vector.extract_strided_slice %4 {offsets = [0, 0], sizes = [1, 16], strides = [1, 1]} : vector<3x16xf32> to vector<1x16xf32>
    %192 = vector.broadcast %191 : vector<1x16xf32> to vector<3x16xf32>
    %193 = arith.mulf %190, %192 : vector<3x16xf32>
    %194 = arith.addf %185, %193 : vector<3x16xf32>
    %195 = vector.extract_strided_slice %180 {offsets = [0, 8], sizes = [3, 8], strides = [1, 1]} : vector<3x24xf32> to vector<3x8xf32>
    %cst_83 = arith.constant dense<0.000000e+00> : vector<3x16xf32>
    %196 = tpu.matmul %195, %176, %cst_83 {dimension_numbers = #tpu.dot_dimension_numbers<[1], [0], [0], [1], [0, 0, 1, 1], [], []>} : vector<3x8xf32>, vector<8x16xf32>, vector<3x16xf32> -> vector<3x16xf32>
    %197 = vector.extract_strided_slice %4 {offsets = [1, 0], sizes = [1, 16], strides = [1, 1]} : vector<3x16xf32> to vector<1x16xf32>
    %198 = vector.broadcast %197 : vector<1x16xf32> to vector<3x16xf32>
    %199 = arith.mulf %196, %198 : vector<3x16xf32>
    %200 = arith.addf %194, %199 : vector<3x16xf32>
    %201 = vector.extract_strided_slice %180 {offsets = [0, 16], sizes = [3, 8], strides = [1, 1]} : vector<3x24xf32> to vector<3x8xf32>
    %cst_84 = arith.constant dense<0.000000e+00> : vector<3x16xf32>
    %202 = tpu.matmul %201, %176, %cst_84 {dimension_numbers = #tpu.dot_dimension_numbers<[1], [0], [0], [1], [0, 0, 1, 1], [], []>} : vector<3x8xf32>, vector<8x16xf32>, vector<3x16xf32> -> vector<3x16xf32>
    %cst_85 = arith.constant 0.000000e+00 : f32
    %203 = vector.broadcast %cst_85 : f32 to vector<3x1xf32>
    %204 = vector.extract_strided_slice %202 {offsets = [0, 1], sizes = [3, 15], strides = [1, 1]} : vector<3x16xf32> to vector<3x15xf32>
    %205 = tpu.concatenate %204, %203 in 1 : vector<3x15xf32>, vector<3x1xf32> -> vector<3x16xf32>
    %206 = vector.extract_strided_slice %4 {offsets = [2, 0], sizes = [1, 16], strides = [1, 1]} : vector<3x16xf32> to vector<1x16xf32>
    %207 = vector.broadcast %206 : vector<1x16xf32> to vector<3x16xf32>
    %208 = arith.mulf %205, %207 : vector<3x16xf32>
    %209 = arith.addf %200, %208 : vector<3x16xf32>
    %210 = vector.broadcast %181 : vector<3x1xf32> to vector<3x16xf32>
    %211 = arith.addf %209, %210 : vector<3x16xf32>
    %212 = vector.extract_strided_slice %183 {offsets = [0, 0], sizes = [8, 8], strides = [1, 1]} : vector<24x8xf32> to vector<8x8xf32>
    %cst_86 = arith.constant dense<0.000000e+00> : vector<8x16xf32>
    %213 = tpu.matmul %212, %176, %cst_86 {dimension_numbers = #tpu.dot_dimension_numbers<[1], [0], [0], [1], [0, 0, 1, 1], [], []>} : vector<8x8xf32>, vector<8x16xf32>, vector<8x16xf32> -> vector<8x16xf32>
    %214 = vector.extract_strided_slice %183 {offsets = [8, 0], sizes = [8, 8], strides = [1, 1]} : vector<24x8xf32> to vector<8x8xf32>
    %cst_87 = arith.constant dense<0.000000e+00> : vector<8x16xf32>
    %215 = tpu.matmul %214, %176, %cst_87 {dimension_numbers = #tpu.dot_dimension_numbers<[1], [0], [0], [1], [0, 0, 1, 1], [], []>} : vector<8x8xf32>, vector<8x16xf32>, vector<8x16xf32> -> vector<8x16xf32>
    %216 = vector.extract_strided_slice %183 {offsets = [16, 0], sizes = [8, 8], strides = [1, 1]} : vector<24x8xf32> to vector<8x8xf32>
    %cst_88 = arith.constant dense<0.000000e+00> : vector<8x16xf32>
    %217 = tpu.matmul %216, %176, %cst_88 {dimension_numbers = #tpu.dot_dimension_numbers<[1], [0], [0], [1], [0, 0, 1, 1], [], []>} : vector<8x8xf32>, vector<8x16xf32>, vector<8x16xf32> -> vector<8x16xf32>
    %cst_89 = arith.constant -1.000000e+00 : f32
    %218 = vector.broadcast %cst_89 : f32 to vector<1x16xf32>
    %219 = arith.addf %3, %218 : vector<1x16xf32>
    %220 = vector.extract_strided_slice %211 {offsets = [0, 0], sizes = [1, 16], strides = [1, 1]} : vector<3x16xf32> to vector<1x16xf32>
    %221 = arith.addf %219, %220 : vector<1x16xf32>
    %222 = vector.broadcast %221 : vector<1x16xf32> to vector<16x16xf32>
    %223 = vector.broadcast %1 : vector<16x1xf32> to vector<16x16xf32>
    %224 = arith.subf %222, %223 : vector<16x16xf32>
    %225 = math.absf %224 : vector<16x16xf32>
    %cst_90 = arith.constant 1.000000e+00 : f32
    %226 = vector.broadcast %cst_90 : f32 to vector<16x16xf32>
    %227 = arith.subf %226, %225 : vector<16x16xf32>
    %cst_91 = arith.constant 0.000000e+00 : f32
    %228 = vector.broadcast %cst_91 : f32 to vector<16x16xf32>
    %229 = arith.maximumf %228, %227 : vector<16x16xf32>
    %c0_92 = arith.constant 0 : index
    %c0_93 = arith.constant 0 : index
    %230 = vector.load %arg8[%c0_92, %c0_93] : memref<48x16xf32, #tpu.memory_space<vmem>>, vector<16x16xf32>
    tpu.vector_store %arg8[%c0_92, %c0_93], %229 {strides = array<i32>} : memref<48x16xf32, #tpu.memory_space<vmem>>, vector<16x16xf32>,
    %cst_94 = arith.constant 0.000000e+00 : f32
    %231 = vector.broadcast %cst_94 : f32 to vector<1x16xf32>
    %232 = arith.addf %3, %231 : vector<1x16xf32>
    %233 = vector.extract_strided_slice %211 {offsets = [1, 0], sizes = [1, 16], strides = [1, 1]} : vector<3x16xf32> to vector<1x16xf32>
    %234 = arith.addf %232, %233 : vector<1x16xf32>
    %235 = vector.broadcast %234 : vector<1x16xf32> to vector<16x16xf32>
    %236 = vector.broadcast %1 : vector<16x1xf32> to vector<16x16xf32>
    %237 = arith.subf %235, %236 : vector<16x16xf32>
    %238 = math.absf %237 : vector<16x16xf32>
    %cst_95 = arith.constant 1.000000e+00 : f32
    %239 = vector.broadcast %cst_95 : f32 to vector<16x16xf32>
    %240 = arith.subf %239, %238 : vector<16x16xf32>
    %cst_96 = arith.constant 0.000000e+00 : f32
    %241 = vector.broadcast %cst_96 : f32 to vector<16x16xf32>
    %242 = arith.maximumf %241, %240 : vector<16x16xf32>
    %c16_97 = arith.constant 16 : index
    %c0_98 = arith.constant 0 : index
    %243 = vector.load %arg8[%c16_97, %c0_98] : memref<48x16xf32, #tpu.memory_space<vmem>>, vector<16x16xf32>
    tpu.vector_store %arg8[%c16_97, %c0_98], %242 {strides = array<i32>} : memref<48x16xf32, #tpu.memory_space<vmem>>, vector<16x16xf32>,
    %cst_99 = arith.constant 1.000000e+00 : f32
    %244 = vector.broadcast %cst_99 : f32 to vector<1x16xf32>
    %245 = arith.addf %3, %244 : vector<1x16xf32>
    %246 = vector.extract_strided_slice %211 {offsets = [2, 0], sizes = [1, 16], strides = [1, 1]} : vector<3x16xf32> to vector<1x16xf32>
    %247 = arith.addf %245, %246 : vector<1x16xf32>
    %248 = vector.broadcast %247 : vector<1x16xf32> to vector<16x16xf32>
    %249 = vector.broadcast %1 : vector<16x1xf32> to vector<16x16xf32>
    %250 = arith.subf %248, %249 : vector<16x16xf32>
    %251 = math.absf %250 : vector<16x16xf32>
    %cst_100 = arith.constant 1.000000e+00 : f32
    %252 = vector.broadcast %cst_100 : f32 to vector<16x16xf32>
    %253 = arith.subf %252, %251 : vector<16x16xf32>
    %cst_101 = arith.constant 0.000000e+00 : f32
    %254 = vector.broadcast %cst_101 : f32 to vector<16x16xf32>
    %255 = arith.maximumf %254, %253 : vector<16x16xf32>
    %c32_102 = arith.constant 32 : index
    %c0_103 = arith.constant 0 : index
    %256 = vector.load %arg8[%c32_102, %c0_103] : memref<48x16xf32, #tpu.memory_space<vmem>>, vector<16x16xf32>
    tpu.vector_store %arg8[%c32_102, %c0_103], %255 {strides = array<i32>} : memref<48x16xf32, #tpu.memory_space<vmem>>, vector<16x16xf32>,
    %257 = tpu.concatenate %213, %215, %217 in 1 : vector<8x16xf32>, vector<8x16xf32>, vector<8x16xf32> -> vector<8x48xf32>
    %c0_104 = arith.constant 0 : index
    %c0_105 = arith.constant 0 : index
    %258 = vector.load %arg8[%c0_104, %c0_105] : memref<48x16xf32, #tpu.memory_space<vmem>>, vector<48x16xf32>
    %cst_106 = arith.constant dense<0.000000e+00> : vector<8x16xf32>
    %259 = tpu.matmul %257, %258, %cst_106 {dimension_numbers = #tpu.dot_dimension_numbers<[1], [0], [0], [1], [0, 0, 1, 1], [], []>} : vector<8x48xf32>, vector<48x16xf32>, vector<8x16xf32> -> vector<8x16xf32>
    %260 = vector.broadcast %184 : vector<8x1xf32> to vector<8x16xf32>
    %261 = arith.addf %259, %260 : vector<8x16xf32>
    %c0_107 = arith.constant 0 : index
    %c0_108 = arith.constant 0 : index
    %262 = vector.load %arg6[%c0_107, %c0_108] : memref<8x8xf32, #tpu.memory_space<vmem>>, vector<8x8xf32>
    %cst_109 = arith.constant dense<0.000000e+00> : vector<8x16xf32>
    %263 = tpu.matmul %262, %6, %cst_109 {dimension_numbers = #tpu.dot_dimension_numbers<[1], [0], [0], [1], [0, 0, 1, 1], [], []>} : vector<8x8xf32>, vector<8x16xf32>, vector<8x16xf32> -> vector<8x16xf32>
    %264 = arith.addf %261, %263 : vector<8x16xf32>
    %c0_110 = arith.constant 0 : index
    %c0_111 = arith.constant 0 : index
    %c0_112 = arith.constant 0 : index
    %265 = vector.load %arg7[%c0_110, %c0_111, %c0_112] : memref<1x8x16xf32, #tpu.memory_space<vmem>>, vector<1x8x16xf32>
    %266 = vector.shape_cast %265 : vector<1x8x16xf32> to vector<8x16xf32>
    %267 = vector.shape_cast %264 : vector<8x16xf32> to vector<1x8x16xf32>
    tpu.vector_store %arg7[%c0_110, %c0_111, %c0_112], %267 {strides = array<i32>} : memref<1x8x16xf32, #tpu.memory_space<vmem>>, vector<1x8x16xf32>,
    return
  }
  func.func @transform_0(%arg0: i32) -> (i32, i32, i32) {
    %c0_i32 = arith.constant 0 : i32
    %c0_i32_0 = arith.constant 0 : i32
    %c0_i32_1 = arith.constant 0 : i32
    return %arg0, %c0_i32, %c0_i32_0 : i32, i32, i32
  }
  func.func @transform_1(%arg0: i32) -> (i32, i32) {
    %c0_i32 = arith.constant 0 : i32
    %c0_i32_0 = arith.constant 0 : i32
    %c0_i32_1 = arith.constant 0 : i32
    return %c0_i32, %c0_i32_0 : i32, i32
  }
  func.func @transform_2(%arg0: i32) -> (i32, i32, i32) {
    %c0_i32 = arith.constant 0 : i32
    %c0_i32_0 = arith.constant 0 : i32
    %c0_i32_1 = arith.constant 0 : i32
    %c0_i32_2 = arith.constant 0 : i32
    return %c0_i32, %c0_i32_0, %c0_i32_1 : i32, i32, i32
  }
  func.func @transform_3(%arg0: i32) -> (i32, i32, i32) {
    %c0_i32 = arith.constant 0 : i32
    %c0_i32_0 = arith.constant 0 : i32
    %c0_i32_1 = arith.constant 0 : i32
    %c0_i32_2 = arith.constant 0 : i32
    return %c0_i32, %c0_i32_0, %c0_i32_1 : i32, i32, i32
  }
  func.func @transform_4(%arg0: i32) -> (i32, i32, i32) {
    %c0_i32 = arith.constant 0 : i32
    %c0_i32_0 = arith.constant 0 : i32
    %c0_i32_1 = arith.constant 0 : i32
    %c0_i32_2 = arith.constant 0 : i32
    return %c0_i32, %c0_i32_0, %c0_i32_1 : i32, i32, i32
  }
  func.func @transform_5(%arg0: i32) -> (i32, i32) {
    %c0_i32 = arith.constant 0 : i32
    %c0_i32_0 = arith.constant 0 : i32
    %c0_i32_1 = arith.constant 0 : i32
    return %c0_i32, %c0_i32_0 : i32, i32
  }
  func.func @transform_6(%arg0: i32) -> (i32, i32, i32) {
    %c0_i32 = arith.constant 0 : i32
    %c0_i32_0 = arith.constant 0 : i32
    %c0_i32_1 = arith.constant 0 : i32
    return %arg0, %c0_i32, %c0_i32_0 : i32, i32, i32
  }
}

</mosaic_0001>

<llo_original>
// kernel: tpu_custom_call.1
$region0: #{tpu_custom_call.1}
  #allocation0 [shape = 'u32[]', space=smem, size = 0x4, offset = 0x4, fixed_abs, tag = 'smem constant byte address 0x4 - core index']
  #allocation1 [shape = 'u32[144,128]{1,0:T(1,128)}', space=vmem, size = 0x12000, scoped, tag = 'internal scratch']
  #allocation2 [shape = 'f32[48,16]{1,0:T(8,128)}', space=vmem, size = 0x6000, scoped, tag = 'scratch operand']
  %s0 = inlined_call_operand.vmem [shape: f32[2,8,16], index: 0, kind: input, shape index: {}]
  %s1 = inlined_call_operand.vmem [shape: f32[3,16], index: 1, kind: input, shape index: {}]
  %s2 = inlined_call_operand.vmem [shape: f32[3,3,24], index: 2, kind: input, shape index: {}]
  %s3 = inlined_call_operand.vmem [shape: f32[3,24,8], index: 3, kind: input, shape index: {}]
  %s4 = inlined_call_operand.vmem [shape: f32[3,11,1], index: 4, kind: input, shape index: {}]
  %s5 = inlined_call_operand.vmem [shape: f32[8,8], index: 5, kind: input, shape index: {}]
  %s6 = inlined_call_operand.hbm [shape: f32[2,8,16], index: 6, kind: output, shape index: {}]
  %s7 = sld [smem:[#allocation0]]
  $region57: #{tpu_custom_call.1} parent=0
    _
  %s9 = ssub.s32 1, %s7
  %s10 = scalar_select 0, %s9, %s7
  $region1: #{tpu_custom_call.1} parent=0
    #allocation3 [shape = 'u8[8192]{0}', space=vmem, size = 0x2000, scoped, tag = 'output window, operand 0']
    #allocation4 [shape = 's32[2]{0}', space=sflag, size = 0x8, scoped, tag = 'scoped memory for tpu_custom_call.1']
    %11 = vsyncpa [#allocation4], 0
    %s12 = scalar_lea.sflag [#allocation4], 1
    %13 = vsyncpa %s12, 0
    loop: start=0, step=1, limit=4
    $region2: #{tpu_custom_call.1} parent=1 // loop_pre_header
      _
    $region3: #{tpu_custom_call.1} parent=1 // loop_header
      %s15 = sphi 0, %s19
      %p16 = scmp.ge.s32.totalorder %s15, 4
      %s25 = sphi 0, %s27
      %s28 = sphi 0, %s25
      %s29 = sphi 0, %s28
      %s45 = sphi 0, %s29
      %s49 = sphi 0, %s49
      %s51 = sphi 0, %s49
      %s52 = sphi 0, %s51
      %s66 = sphi 0, %s52
      %s70 = sphi 0, %s70
      %s72 = sphi 0, %s70
      %s73 = sphi 0, %s72
      %s87 = sphi 0, %s73
      %s91 = sphi 0, %s91
      %s93 = sphi 0, %s91
      %s94 = sphi 0, %s93
      %s108 = sphi 0, %s94
      %s112 = sphi 0, %s112
      %s114 = sphi 0, %s112
      %s115 = sphi 0, %s114
      %s129 = sphi 0, %s115
      %s133 = sphi 0, %s133
      %s135 = sphi 0, %s133
      %s136 = sphi 0, %s135
      %s150 = sphi 0, %s136
      %s156 = sphi 0, %s158
      %s159 = sphi 0, %s156
      %s160 = sphi 0, %s159
      %s176 = sphi 0, %s160
    $region4: #{tpu_custom_call.1} parent=1 // loop_header_branch
      %18 = sbr.rel (%p16) target = $region8
    $region5: #{tpu_custom_call.1} parent=1 // loop_body
      %s20 = ssub.s32 %s15, 1
      %s21 = ssub.s32 %s15, 2
      %s22 = sadd.s32 %s15, 1
      %s23 = ssub.s32 %s15, %s22
      %p24 = scmp.eq.s32.totalorder %s23, 0
      %s26 = sadd.s32 %s25, 1
      %s27 = scalar_select %p24, %s25, %s26
      %p30 = pneg %p24
      %p31 = scmp.eq.s32.totalorder %s15, 1
      %p32 = por %p30, %p31
      %p33 = scmp.ne.s32.totalorder %s25, %s28
      %p34 = scmp.eq.s32.totalorder %s15, 0
      %p35 = por %p33, %p34
      %p36 = scmp.ne.s32.totalorder %s25, %s28
      %p37 = scmp.eq.s32.totalorder %s20, 1
      %p38 = por %p36, %p37
      %p39 = scmp.ne.s32.totalorder %s28, %s29
      %p40 = scmp.eq.s32.totalorder %s20, 0
      %p41 = por %p39, %p40
      %p42 = scmp.ne.s32.totalorder %s28, %s29
      %p43 = scmp.eq.s32.totalorder %s21, 1
      %p44 = por %p42, %p43
      %p46 = scmp.ne.s32.totalorder %s29, %s45
      %p47 = scmp.eq.s32.totalorder %s21, 0
      %p48 = por %p46, %p47
      %s50 = sadd.s32 %s49, 1
      %p53 = scmp.eq.s32.totalorder %s15, 1
      %p54 = scmp.ne.s32.totalorder %s49, %s51
      %p55 = scmp.eq.s32.totalorder %s15, 0
      %p56 = por %p54, %p55
      %p57 = scmp.ne.s32.totalorder %s49, %s51
      %p58 = scmp.eq.s32.totalorder %s20, 1
      %p59 = por %p57, %p58
      %p60 = scmp.ne.s32.totalorder %s51, %s52
      %p61 = scmp.eq.s32.totalorder %s20, 0
      %p62 = por %p60, %p61
      %p63 = scmp.ne.s32.totalorder %s51, %s52
      %p64 = scmp.eq.s32.totalorder %s21, 1
      %p65 = por %p63, %p64
      %p67 = scmp.ne.s32.totalorder %s52, %s66
      %p68 = scmp.eq.s32.totalorder %s21, 0
      %p69 = por %p67, %p68
      %s71 = sadd.s32 %s70, 1
      %p74 = scmp.eq.s32.totalorder %s15, 1
      %p75 = scmp.ne.s32.totalorder %s70, %s72
      %p76 = scmp.eq.s32.totalorder %s15, 0
      %p77 = por %p75, %p76
      %p78 = scmp.ne.s32.totalorder %s70, %s72
      %p79 = scmp.eq.s32.totalorder %s20, 1
      %p80 = por %p78, %p79
      %p81 = scmp.ne.s32.totalorder %s72, %s73
      %p82 = scmp.eq.s32.totalorder %s20, 0
      %p83 = por %p81, %p82
      %p84 = scmp.ne.s32.totalorder %s72, %s73
      %p85 = scmp.eq.s32.totalorder %s21, 1
      %p86 = por %p84, %p85
      %p88 = scmp.ne.s32.totalorder %s73, %s87
      %p89 = scmp.eq.s32.totalorder %s21, 0
      %p90 = por %p88, %p89
      %s92 = sadd.s32 %s91, 1
      %p95 = scmp.eq.s32.totalorder %s15, 1
      %p96 = scmp.ne.s32.totalorder %s91, %s93
      %p97 = scmp.eq.s32.totalorder %s15, 0
      %p98 = por %p96, %p97
      %p99 = scmp.ne.s32.totalorder %s91, %s93
      %p100 = scmp.eq.s32.totalorder %s20, 1
      %p101 = por %p99, %p100
      %p102 = scmp.ne.s32.totalorder %s93, %s94
      %p103 = scmp.eq.s32.totalorder %s20, 0
      %p104 = por %p102, %p103
      %p105 = scmp.ne.s32.totalorder %s93, %s94
      %p106 = scmp.eq.s32.totalorder %s21, 1
      %p107 = por %p105, %p106
      %p109 = scmp.ne.s32.totalorder %s94, %s108
      %p110 = scmp.eq.s32.totalorder %s21, 0
      %p111 = por %p109, %p110
      %s113 = sadd.s32 %s112, 1
      %p116 = scmp.eq.s32.totalorder %s15, 1
      %p117 = scmp.ne.s32.totalorder %s112, %s114
      %p118 = scmp.eq.s32.totalorder %s15, 0
      %p119 = por %p117, %p118
      %p120 = scmp.ne.s32.totalorder %s112, %s114
      %p121 = scmp.eq.s32.totalorder %s20, 1
      %p122 = por %p120, %p121
      %p123 = scmp.ne.s32.totalorder %s114, %s115
      %p124 = scmp.eq.s32.totalorder %s20, 0
      %p125 = por %p123, %p124
      %p126 = scmp.ne.s32.totalorder %s114, %s115
      %p127 = scmp.eq.s32.totalorder %s21, 1
      %p128 = por %p126, %p127
      %p130 = scmp.ne.s32.totalorder %s115, %s129
      %p131 = scmp.eq.s32.totalorder %s21, 0
      %p132 = por %p130, %p131
      %s134 = sadd.s32 %s133, 1
      %p137 = scmp.eq.s32.totalorder %s15, 1
      %p138 = scmp.ne.s32.totalorder %s133, %s135
      %p139 = scmp.eq.s32.totalorder %s15, 0
      %p140 = por %p138, %p139
      %p141 = scmp.ne.s32.totalorder %s133, %s135
      %p142 = scmp.eq.s32.totalorder %s20, 1
      %p143 = por %p141, %p142
      %p144 = scmp.ne.s32.totalorder %s135, %s136
      %p145 = scmp.eq.s32.totalorder %s20, 0
      %p146 = por %p144, %p145
      %p147 = scmp.ne.s32.totalorder %s135, %s136
      %p148 = scmp.eq.s32.totalorder %s21, 1
      %p149 = por %p147, %p148
      %p151 = scmp.ne.s32.totalorder %s136, %s150
      %p152 = scmp.eq.s32.totalorder %s21, 0
      %p153 = por %p151, %p152
      %s154 = ssub.s32 %s15, %s22
      %p155 = scmp.eq.s32.totalorder %s154, 0
      %s157 = sadd.s32 %s156, 1
      %s158 = scalar_select %p155, %s156, %s157
      %p161 = pneg %p155
      %p162 = scmp.eq.s32.totalorder %s15, 1
      %p163 = por %p161, %p162
      %p164 = scmp.ne.s32.totalorder %s156, %s159
      %p165 = scmp.eq.s32.totalorder %s15, 0
      %p166 = por %p164, %p165
      %p167 = scmp.ne.s32.totalorder %s156, %s159
      %p168 = scmp.eq.s32.totalorder %s20, 1
      %p169 = por %p167, %p168
      %p170 = scmp.ne.s32.totalorder %s159, %s160
      %p171 = scmp.eq.s32.totalorder %s20, 0
      %p172 = por %p170, %p171
      %p173 = scmp.ne.s32.totalorder %s159, %s160
      %p174 = scmp.eq.s32.totalorder %s21, 1
      %p175 = por %p173, %p174
      %p177 = scmp.ne.s32.totalorder %s160, %s176
      %p178 = scmp.eq.s32.totalorder %s21, 0
      %p179 = por %p177, %p178
      %p180 = scmp.le.s32.totalorder 1, %s15
      %p181 = scmp.lt.s32.totalorder %s15, 3
      %p182 = pnand %p180, %p181
      %p183 = pneg %p182
      // Predicated region
      $region9: #{tpu_custom_call.1} parent=5 // pred_check
        _
      $region10: #{tpu_custom_call.1} parent=5 // pred_check_branch
        %185 = sbr.rel (%p182) target = $region12
      $region11: #{tpu_custom_call.1} parent=5 // pred_region
        %s186 = ssub.s32 %s15, 1
        // Predicated region
        $region13: #{tpu_custom_call.1} parent=11 // pred_check
          %p187 = pneg %p62
        $region14: #{tpu_custom_call.1} parent=11 // pred_check_branch
          %189 = sbr.rel (%p187) target = $region16
        $region15: #{tpu_custom_call.1} parent=11 // pred_region
          _
        $region16: #{tpu_custom_call.1} parent=11 // pred_fallthru
          _
        // Predicated region
        $region17: #{tpu_custom_call.1} parent=11 // pred_check
          %p190 = pneg %p83
        $region18: #{tpu_custom_call.1} parent=11 // pred_check_branch
          %192 = sbr.rel (%p190) target = $region20
        $region19: #{tpu_custom_call.1} parent=11 // pred_region
          _
        $region20: #{tpu_custom_call.1} parent=11 // pred_fallthru
          _
        // Predicated region
        $region21: #{tpu_custom_call.1} parent=11 // pred_check
          %p193 = pneg %p104
        $region22: #{tpu_custom_call.1} parent=11 // pred_check_branch
          %195 = sbr.rel (%p193) target = $region24
        $region23: #{tpu_custom_call.1} parent=11 // pred_region
          _
        $region24: #{tpu_custom_call.1} parent=11 // pred_fallthru
          _
        // Predicated region
        $region25: #{tpu_custom_call.1} parent=11 // pred_check
          %p196 = pneg %p125
        $region26: #{tpu_custom_call.1} parent=11 // pred_check_branch
          %198 = sbr.rel (%p196) target = $region28
        $region27: #{tpu_custom_call.1} parent=11 // pred_region
          _
        $region28: #{tpu_custom_call.1} parent=11 // pred_fallthru
          _
        // Predicated region
        $region29: #{tpu_custom_call.1} parent=11 // pred_check
          %p199 = pneg %p146
        $region30: #{tpu_custom_call.1} parent=11 // pred_check_branch
          %201 = sbr.rel (%p199) target = $region32
        $region31: #{tpu_custom_call.1} parent=11 // pred_region
          _
        $region32: #{tpu_custom_call.1} parent=11 // pred_fallthru
          _
      $region12: #{tpu_custom_call.1} parent=5 // pred_fallthru
        _
      %p202 = scmp.lt.s32.totalorder %s15, 2
      // Predicated region
      $region33: #{tpu_custom_call.1} parent=5 // pred_check
        %p203 = pneg %p202
      $region34: #{tpu_custom_call.1} parent=5 // pred_check_branch
        %205 = sbr.rel (%p203) target = $region36
      $region35: #{tpu_custom_call.1} parent=5 // pred_region
        // Predicated region
        $region37: #{tpu_custom_call.1} parent=35 // pred_check
          %p206 = pneg %p35
        $region38: #{tpu_custom_call.1} parent=35 // pred_check_branch
          %208 = sbr.rel (%p206) target = $region40
        $region39: #{tpu_custom_call.1} parent=35 // pred_region
          %p209 = scmp.lt.s32.totalorder %s15, 1
          %s210 = scalar_select %p209, %s15, 1
          %s211 = smul.addr %s210, 8
          %s212 = scalar_lea.vmem %s0, %s211
        $region40: #{tpu_custom_call.1} parent=35 // pred_fallthru
          _
      $region36: #{tpu_custom_call.1} parent=5 // pred_fallthru
        _
      %p213 = scmp.le.s32.totalorder 1, %s15
      %p214 = scmp.lt.s32.totalorder %s15, 3
      %p215 = pnand %p213, %p214
      %p216 = pneg %p215
      // Predicated region
      $region41: #{tpu_custom_call.1} parent=5 // pred_check
        _
      $region42: #{tpu_custom_call.1} parent=5 // pred_check_branch
        %218 = sbr.rel (%p215) target = $region44
      $region43: #{tpu_custom_call.1} parent=5 // pred_region
        %s219 = ssub.s32 %s15, 1
        %p220 = scmp.lt.s32.totalorder %s20, 1
        %s221 = scalar_select %p220, %s20, 1
        %s222 = smul.addr %s221, 8
        %s223 = scalar_lea.vmem %s0, %s222
        %p224 = pneg %p41
        %p225 = pneg %p38
        %p226 = pneg %p62
        %p227 = pneg %p59
        %p228 = pneg %p83
        %p229 = pneg %p80
        %p230 = pneg %p104
        %p231 = pneg %p101
        %p232 = pneg %p125
        %p233 = pneg %p122
        %p234 = pneg %p146
        %p235 = pneg %p143
        %p236 = pneg %p172
        %p237 = pneg %p169
        %s238 = sand.u32 %s159, 1
        %s239 = scalar_lea.sflag [#allocation4], %s238
        %s240 = sand.u32 %s159, 1
        %s241 = smul.addr %s240, 8
        %s242 = scalar_lea.vmem [#allocation3], %s241
        %p243 = scmp.lt.s32.totalorder %s20, 1
        %s244 = scalar_select %p243, %s20, 1
        %s245 = smul.addr %s244, 8
        %s246 = scalar_lea.vmem %s0, %s245
        %v247 = vlaneseq
        %v248 = vshrl.u32 %v247, 7
        %v249 = vadd.s32 %v248, 8
        %v250 = vcvt.s32.f32 %v248
        %v251 = vcvt.s32.f32 %v249
        %v252 = vlaneseq
        %v253 = vand.u32 %v252, 127
        %v254 = vcvt.s32.f32 %v253
        %v255 = vld [vmem:[%s1] sm:$0x7]
        %v256 = vld [vmem:[%s246] sm:$0xff]
        %v257 = vld [vmem:[%s4] sm:$0xff]
        %v258 = vld [vmem:[%s4 + $0x8] sm:$0x7]
        %v259 = vld [vmem:[%s2] sm:$0x7]
        %v260 = vld [vmem:[%s3] sm:$0xff]
        %v261 = vld [vmem:[%s3 + $0x8] sm:$0xff]
        %v262 = vld [vmem:[%s3 + $0x10] sm:$0xff]
        %vm263 = vcmask 64512
        %v265 = vsel %vm263, %v259, 0
        %267 = vmatprep.subr.mxu0 0.0
        %268 = vmatpush1.msra.mxu0 %v256
        %269 = vmatprep.subr.mxu0 0.0
        %270 = vmatpush1.msra.mxu0 0.0
        %271 = vmatprep.subr.mxu0 0.0
        %272 = vmatpush1.msra.mxu0 0.0
        %273 = vmatprep.subr.mxu0 0.0
        %274 = vmatpush1.msra.mxu0 0.0
        %275 = vmatprep.subr.mxu0 0.0
        %276 = vmatpush1.msra.mxu0 0.0
        %277 = vmatprep.subr.mxu0 0.0
        %278 = vmatpush1.msra.mxu0 0.0
        %279 = vmatprep.subr.mxu0 0.0
        %280 = vmatpush1.msra.mxu0 0.0
        %281 = vmatprep.subr.mxu0 0.0
        %282 = vmatpush1.msra.mxu0 0.0
        %283 = vmatprep.subr.mxu0 0.0
        %284 = vmatpush1.msra.mxu0 0.0
        %285 = vmatprep.subr.mxu0 0.0
        %286 = vmatpush1.msra.mxu0 0.0
        %287 = vmatprep.subr.mxu0 0.0
        %288 = vmatpush1.msra.mxu0 0.0
        %289 = vmatprep.subr.mxu0 0.0
        %290 = vmatpush1.msra.mxu0 0.0
        %291 = vmatprep.subr.mxu0 0.0
        %292 = vmatpush1.msra.mxu0 0.0
        %293 = vmatprep.subr.mxu0 0.0
        %294 = vmatpush1.msra.mxu0 0.0
        %295 = vmatprep.subr.mxu0 0.0
        %296 = vmatpush1.msra.mxu0 0.0
        %297 = vmatprep.subr.mxu0 0.0
        %298 = vmatpush1.msra.mxu0 0.0
        %299 = vmatprep.subr.mxu0 0.0
        %300 = vmatpush1.msra.mxu0 0.0
        %301 = vmatprep.subr.mxu0 0.0
        %302 = vmatpush1.msra.mxu0 0.0
        %303 = vmatprep.subr.mxu0 0.0
        %304 = vmatpush1.msra.mxu0 0.0
        %305 = vmatprep.subr.mxu0 0.0
        %306 = vmatpush1.msra.mxu0 0.0
        %307 = vmatprep.subr.mxu0 0.0
        %308 = vmatpush1.msra.mxu0 0.0
        %309 = vmatprep.subr.mxu0 0.0
        %310 = vmatpush1.msra.mxu0 0.0
        %311 = vmatprep.subr.mxu0 0.0
        %312 = vmatpush1.msra.mxu0 0.0
        %313 = vmatprep.subr.mxu0 0.0
        %314 = vmatpush1.msra.mxu0 0.0
        %315 = vmatprep.subr.mxu0 0.0
        %316 = vmatpush1.msra.mxu0 0.0
        %317 = vmatprep.subr.mxu0 0.0
        %318 = vmatpush1.msra.mxu0 0.0
        %319 = vmatprep.subr.mxu0 0.0
        %320 = vmatpush1.msra.mxu0 0.0
        %321 = vmatprep.subr.mxu0 0.0
        %322 = vmatpush1.msra.mxu0 0.0
        %323 = vmatprep.subr.mxu0 0.0
        %324 = vmatpush1.msra.mxu0 0.0
        %325 = vmatprep.subr.mxu0 0.0
        %326 = vmatpush1.msra.mxu0 0.0
        %327 = vmatprep.subr.mxu0 0.0
        %328 = vmatpush1.msra.mxu0 0.0
        %329 = vmatprep.subr.mxu0 0.0
        %330 = vmatpush1.msra.mxu0 0.0
        %331 = vmatprep.mubr.f32.mxu0 0.0
        %332 = vmatmul.mubr.f32.gmra.mrb[0].mxu0 %v265
        %v333 = vpop.f32.mrb[0].mxu0
        %v334 = vadd.f32 0.0, %v333
        %v335 = vpop.f32.mrb[0].mxu0
        %336 = vdwg.mxu0
        %338 = vrot.lane.b32.xlu0 %v334, 1
        %v339 = vpop.permute.xlu0 %338
        %vm341 = vcmask 7168
        %v342 = vsel %vm341, 0.0, %v339
        %v343 = vlaneseq
        %v344 = vshrl.u32 %v343, 7
        %v345 = vsub.s32 0, %v344
        %v346 = vrot.slane %v255, %v345
        %v347 = vmul.f32 %v342, %v346
        %v348 = vadd.f32 %v347, 0.0
        %349 = vrot.lane.b32.xlu0 %v259, 120
        %v350 = vpop.permute.xlu0 %349
        %v351 = vsel %vm263, %v350, 0
        %353 = vmatprep.subr.mxu0 0.0
        %354 = vmatpush1.msra.mxu0 %v256
        %355 = vmatprep.subr.mxu0 0.0
        %356 = vmatpush1.msra.mxu0 0.0
        %357 = vmatprep.subr.mxu0 0.0
        %358 = vmatpush1.msra.mxu0 0.0
        %359 = vmatprep.subr.mxu0 0.0
        %360 = vmatpush1.msra.mxu0 0.0
        %361 = vmatprep.subr.mxu0 0.0
        %362 = vmatpush1.msra.mxu0 0.0
        %363 = vmatprep.subr.mxu0 0.0
        %364 = vmatpush1.msra.mxu0 0.0
        %365 = vmatprep.subr.mxu0 0.0
        %366 = vmatpush1.msra.mxu0 0.0
        %367 = vmatprep.subr.mxu0 0.0
        %368 = vmatpush1.msra.mxu0 0.0
        %369 = vmatprep.subr.mxu0 0.0
        %370 = vmatpush1.msra.mxu0 0.0
        %371 = vmatprep.subr.mxu0 0.0
        %372 = vmatpush1.msra.mxu0 0.0
        %373 = vmatprep.subr.mxu0 0.0
        %374 = vmatpush1.msra.mxu0 0.0
        %375 = vmatprep.subr.mxu0 0.0
        %376 = vmatpush1.msra.mxu0 0.0
        %377 = vmatprep.subr.mxu0 0.0
        %378 = vmatpush1.msra.mxu0 0.0
        %379 = vmatprep.subr.mxu0 0.0
        %380 = vmatpush1.msra.mxu0 0.0
        %381 = vmatprep.subr.mxu0 0.0
        %382 = vmatpush1.msra.mxu0 0.0
        %383 = vmatprep.subr.mxu0 0.0
        %384 = vmatpush1.msra.mxu0 0.0
        %385 = vmatprep.subr.mxu0 0.0
        %386 = vmatpush1.msra.mxu0 0.0
        %387 = vmatprep.subr.mxu0 0.0
        %388 = vmatpush1.msra.mxu0 0.0
        %389 = vmatprep.subr.mxu0 0.0
        %390 = vmatpush1.msra.mxu0 0.0
        %391 = vmatprep.subr.mxu0 0.0
        %392 = vmatpush1.msra.mxu0 0.0
        %393 = vmatprep.subr.mxu0 0.0
        %394 = vmatpush1.msra.mxu0 0.0
        %395 = vmatprep.subr.mxu0 0.0
        %396 = vmatpush1.msra.mxu0 0.0
        %397 = vmatprep.subr.mxu0 0.0
        %398 = vmatpush1.msra.mxu0 0.0
        %399 = vmatprep.subr.mxu0 0.0
        %400 = vmatpush1.msra.mxu0 0.0
        %401 = vmatprep.subr.mxu0 0.0
        %402 = vmatpush1.msra.mxu0 0.0
        %403 = vmatprep.subr.mxu0 0.0
        %404 = vmatpush1.msra.mxu0 0.0
        %405 = vmatprep.subr.mxu0 0.0
        %406 = vmatpush1.msra.mxu0 0.0
        %407 = vmatprep.subr.mxu0 0.0
        %408 = vmatpush1.msra.mxu0 0.0
        %409 = vmatprep.subr.mxu0 0.0
        %410 = vmatpush1.msra.mxu0 0.0
        %411 = vmatprep.subr.mxu0 0.0
        %412 = vmatpush1.msra.mxu0 0.0
        %413 = vmatprep.subr.mxu0 0.0
        %414 = vmatpush1.msra.mxu0 0.0
        %415 = vmatprep.subr.mxu0 0.0
        %416 = vmatpush1.msra.mxu0 0.0
        %417 = vmatprep.mubr.f32.mxu0 0.0
        %418 = vmatmul.mubr.f32.gmra.mrb[0].mxu0 %v351
        %v419 = vpop.f32.mrb[0].mxu0
        %v420 = vadd.f32 0.0, %v419
        %v421 = vpop.f32.mrb[0].mxu0
        %422 = vdwg.mxu0
        %v423 = vlaneseq
        %v424 = vshrl.u32 %v423, 7
        %v425 = vsub.s32 1, %v424
        %v426 = vrot.slane %v255, %v425
        %v427 = vmul.f32 %v420, %v426
        %v428 = vadd.f32 %v348, %v427
        %429 = vrot.lane.b32.xlu0 %v259, 112
        %v430 = vpop.permute.xlu0 %429
        %v431 = vsel %vm263, %v430, 0
        %433 = vmatprep.subr.mxu0 0.0
        %434 = vmatpush1.msra.mxu0 %v256
        %435 = vmatprep.subr.mxu0 0.0
        %436 = vmatpush1.msra.mxu0 0.0
        %437 = vmatprep.subr.mxu0 0.0
        %438 = vmatpush1.msra.mxu0 0.0
        %439 = vmatprep.subr.mxu0 0.0
        %440 = vmatpush1.msra.mxu0 0.0
        %441 = vmatprep.subr.mxu0 0.0
        %442 = vmatpush1.msra.mxu0 0.0
        %443 = vmatprep.subr.mxu0 0.0
        %444 = vmatpush1.msra.mxu0 0.0
        %445 = vmatprep.subr.mxu0 0.0
        %446 = vmatpush1.msra.mxu0 0.0
        %447 = vmatprep.subr.mxu0 0.0
        %448 = vmatpush1.msra.mxu0 0.0
        %449 = vmatprep.subr.mxu0 0.0
        %450 = vmatpush1.msra.mxu0 0.0
        %451 = vmatprep.subr.mxu0 0.0
        %452 = vmatpush1.msra.mxu0 0.0
        %453 = vmatprep.subr.mxu0 0.0
        %454 = vmatpush1.msra.mxu0 0.0
        %455 = vmatprep.subr.mxu0 0.0
        %456 = vmatpush1.msra.mxu0 0.0
        %457 = vmatprep.subr.mxu0 0.0
        %458 = vmatpush1.msra.mxu0 0.0
        %459 = vmatprep.subr.mxu0 0.0
        %460 = vmatpush1.msra.mxu0 0.0
        %461 = vmatprep.subr.mxu0 0.0
        %462 = vmatpush1.msra.mxu0 0.0
        %463 = vmatprep.subr.mxu0 0.0
        %464 = vmatpush1.msra.mxu0 0.0
        %465 = vmatprep.subr.mxu0 0.0
        %466 = vmatpush1.msra.mxu0 0.0
        %467 = vmatprep.subr.mxu0 0.0
        %468 = vmatpush1.msra.mxu0 0.0
        %469 = vmatprep.subr.mxu0 0.0
        %470 = vmatpush1.msra.mxu0 0.0
        %471 = vmatprep.subr.mxu0 0.0
        %472 = vmatpush1.msra.mxu0 0.0
        %473 = vmatprep.subr.mxu0 0.0
        %474 = vmatpush1.msra.mxu0 0.0
        %475 = vmatprep.subr.mxu0 0.0
        %476 = vmatpush1.msra.mxu0 0.0
        %477 = vmatprep.subr.mxu0 0.0
        %478 = vmatpush1.msra.mxu0 0.0
        %479 = vmatprep.subr.mxu0 0.0
        %480 = vmatpush1.msra.mxu0 0.0
        %481 = vmatprep.subr.mxu0 0.0
        %482 = vmatpush1.msra.mxu0 0.0
        %483 = vmatprep.subr.mxu0 0.0
        %484 = vmatpush1.msra.mxu0 0.0
        %485 = vmatprep.subr.mxu0 0.0
        %486 = vmatpush1.msra.mxu0 0.0
        %487 = vmatprep.subr.mxu0 0.0
        %488 = vmatpush1.msra.mxu0 0.0
        %489 = vmatprep.subr.mxu0 0.0
        %490 = vmatpush1.msra.mxu0 0.0
        %491 = vmatprep.subr.mxu0 0.0
        %492 = vmatpush1.msra.mxu0 0.0
        %493 = vmatprep.subr.mxu0 0.0
        %494 = vmatpush1.msra.mxu0 0.0
        %495 = vmatprep.subr.mxu0 0.0
        %496 = vmatpush1.msra.mxu0 0.0
        %497 = vmatprep.mubr.f32.mxu0 0.0
        %498 = vmatmul.mubr.f32.gmra.mrb[0].mxu0 %v431
        %v499 = vpop.f32.mrb[0].mxu0
        %v500 = vadd.f32 0.0, %v499
        %v501 = vpop.f32.mrb[0].mxu0
        %502 = vdwg.mxu0
        %504 = vrot.lane.b32.xlu0 %v500, 127
        %v505 = vpop.permute.xlu0 %504
        %vm507 = vcmask 121856
        %v508 = vsel %vm507, %v505, 0.0
        %v509 = vlaneseq
        %v510 = vshrl.u32 %v509, 7
        %v511 = vsub.s32 2, %v510
        %v512 = vrot.slane %v255, %v511
        %v513 = vmul.f32 %v508, %v512
        %v514 = vadd.f32 %v428, %v513
        %516 = vset.pattern.permute.xlu0 0
        %517 = vperm.xlu0 %516, %v257
        %v518 = vpop.permute.xlu0 %517
        %v520 = vadd.f32 %v514, %v518
        %v522 = vsel %vm263, %v260, 0
        %524 = vmatprep.subr.mxu0 0.0
        %525 = vmatpush1.msra.mxu0 %v256
        %526 = vmatprep.subr.mxu0 0.0
        %527 = vmatpush1.msra.mxu0 0.0
        %528 = vmatprep.subr.mxu0 0.0
        %529 = vmatpush1.msra.mxu0 0.0
        %530 = vmatprep.subr.mxu0 0.0
        %531 = vmatpush1.msra.mxu0 0.0
        %532 = vmatprep.subr.mxu0 0.0
        %533 = vmatpush1.msra.mxu0 0.0
        %534 = vmatprep.subr.mxu0 0.0
        %535 = vmatpush1.msra.mxu0 0.0
        %536 = vmatprep.subr.mxu0 0.0
        %537 = vmatpush1.msra.mxu0 0.0
        %538 = vmatprep.subr.mxu0 0.0
        %539 = vmatpush1.msra.mxu0 0.0
        %540 = vmatprep.subr.mxu0 0.0
        %541 = vmatpush1.msra.mxu0 0.0
        %542 = vmatprep.subr.mxu0 0.0
        %543 = vmatpush1.msra.mxu0 0.0
        %544 = vmatprep.subr.mxu0 0.0
        %545 = vmatpush1.msra.mxu0 0.0
        %546 = vmatprep.subr.mxu0 0.0
        %547 = vmatpush1.msra.mxu0 0.0
        %548 = vmatprep.subr.mxu0 0.0
        %549 = vmatpush1.msra.mxu0 0.0
        %550 = vmatprep.subr.mxu0 0.0
        %551 = vmatpush1.msra.mxu0 0.0
        %552 = vmatprep.subr.mxu0 0.0
        %553 = vmatpush1.msra.mxu0 0.0
        %554 = vmatprep.subr.mxu0 0.0
        %555 = vmatpush1.msra.mxu0 0.0
        %556 = vmatprep.subr.mxu0 0.0
        %557 = vmatpush1.msra.mxu0 0.0
        %558 = vmatprep.subr.mxu0 0.0
        %559 = vmatpush1.msra.mxu0 0.0
        %560 = vmatprep.subr.mxu0 0.0
        %561 = vmatpush1.msra.mxu0 0.0
        %562 = vmatprep.subr.mxu0 0.0
        %563 = vmatpush1.msra.mxu0 0.0
        %564 = vmatprep.subr.mxu0 0.0
        %565 = vmatpush1.msra.mxu0 0.0
        %566 = vmatprep.subr.mxu0 0.0
        %567 = vmatpush1.msra.mxu0 0.0
        %568 = vmatprep.subr.mxu0 0.0
        %569 = vmatpush1.msra.mxu0 0.0
        %570 = vmatprep.subr.mxu0 0.0
        %571 = vmatpush1.msra.mxu0 0.0
        %572 = vmatprep.subr.mxu0 0.0
        %573 = vmatpush1.msra.mxu0 0.0
        %574 = vmatprep.subr.mxu0 0.0
        %575 = vmatpush1.msra.mxu0 0.0
        %576 = vmatprep.subr.mxu0 0.0
        %577 = vmatpush1.msra.mxu0 0.0
        %578 = vmatprep.subr.mxu0 0.0
        %579 = vmatpush1.msra.mxu0 0.0
        %580 = vmatprep.subr.mxu0 0.0
        %581 = vmatpush1.msra.mxu0 0.0
        %582 = vmatprep.subr.mxu0 0.0
        %583 = vmatpush1.msra.mxu0 0.0
        %584 = vmatprep.subr.mxu0 0.0
        %585 = vmatpush1.msra.mxu0 0.0
        %586 = vmatprep.subr.mxu0 0.0
        %587 = vmatpush1.msra.mxu0 0.0
        %588 = vmatprep.mubr.f32.mxu0 0.0
        %589 = vmatmul.mubr.f32.gmra.mrb[0].mxu0 %v522
        %v590 = vpop.f32.mrb[0].mxu0
        %v591 = vadd.f32 0.0, %v590
        %v592 = vpop.f32.mrb[0].mxu0
        %593 = vdwg.mxu0
        %v595 = vsel %vm263, %v261, 0
        %597 = vmatprep.subr.mxu0 0.0
        %598 = vmatpush1.msra.mxu0 %v256
        %599 = vmatprep.subr.mxu0 0.0
        %600 = vmatpush1.msra.mxu0 0.0
        %601 = vmatprep.subr.mxu0 0.0
        %602 = vmatpush1.msra.mxu0 0.0
        %603 = vmatprep.subr.mxu0 0.0
        %604 = vmatpush1.msra.mxu0 0.0
        %605 = vmatprep.subr.mxu0 0.0
        %606 = vmatpush1.msra.mxu0 0.0
        %607 = vmatprep.subr.mxu0 0.0
        %608 = vmatpush1.msra.mxu0 0.0
        %609 = vmatprep.subr.mxu0 0.0
        %610 = vmatpush1.msra.mxu0 0.0
        %611 = vmatprep.subr.mxu0 0.0
        %612 = vmatpush1.msra.mxu0 0.0
        %613 = vmatprep.subr.mxu0 0.0
        %614 = vmatpush1.msra.mxu0 0.0
        %615 = vmatprep.subr.mxu0 0.0
        %616 = vmatpush1.msra.mxu0 0.0
        %617 = vmatprep.subr.mxu0 0.0
        %618 = vmatpush1.msra.mxu0 0.0
        %619 = vmatprep.subr.mxu0 0.0
        %620 = vmatpush1.msra.mxu0 0.0
        %621 = vmatprep.subr.mxu0 0.0
        %622 = vmatpush1.msra.mxu0 0.0
        %623 = vmatprep.subr.mxu0 0.0
        %624 = vmatpush1.msra.mxu0 0.0
        %625 = vmatprep.subr.mxu0 0.0
        %626 = vmatpush1.msra.mxu0 0.0
        %627 = vmatprep.subr.mxu0 0.0
        %628 = vmatpush1.msra.mxu0 0.0
        %629 = vmatprep.subr.mxu0 0.0
        %630 = vmatpush1.msra.mxu0 0.0
        %631 = vmatprep.subr.mxu0 0.0
        %632 = vmatpush1.msra.mxu0 0.0
        %633 = vmatprep.subr.mxu0 0.0
        %634 = vmatpush1.msra.mxu0 0.0
        %635 = vmatprep.subr.mxu0 0.0
        %636 = vmatpush1.msra.mxu0 0.0
        %637 = vmatprep.subr.mxu0 0.0
        %638 = vmatpush1.msra.mxu0 0.0
        %639 = vmatprep.subr.mxu0 0.0
        %640 = vmatpush1.msra.mxu0 0.0
        %641 = vmatprep.subr.mxu0 0.0
        %642 = vmatpush1.msra.mxu0 0.0
        %643 = vmatprep.subr.mxu0 0.0
        %644 = vmatpush1.msra.mxu0 0.0
        %645 = vmatprep.subr.mxu0 0.0
        %646 = vmatpush1.msra.mxu0 0.0
        %647 = vmatprep.subr.mxu0 0.0
        %648 = vmatpush1.msra.mxu0 0.0
        %649 = vmatprep.subr.mxu0 0.0
        %650 = vmatpush1.msra.mxu0 0.0
        %651 = vmatprep.subr.mxu0 0.0
        %652 = vmatpush1.msra.mxu0 0.0
        %653 = vmatprep.subr.mxu0 0.0
        %654 = vmatpush1.msra.mxu0 0.0
        %655 = vmatprep.subr.mxu0 0.0
        %656 = vmatpush1.msra.mxu0 0.0
        %657 = vmatprep.subr.mxu0 0.0
        %658 = vmatpush1.msra.mxu0 0.0
        %659 = vmatprep.subr.mxu0 0.0
        %660 = vmatpush1.msra.mxu0 0.0
        %661 = vmatprep.mubr.f32.mxu0 0.0
        %662 = vmatmul.mubr.f32.gmra.mrb[0].mxu0 %v595
        %v663 = vpop.f32.mrb[0].mxu0
        %v664 = vadd.f32 0.0, %v663
        %v665 = vpop.f32.mrb[0].mxu0
        %666 = vdwg.mxu0
        %v668 = vsel %vm263, %v262, 0
        %670 = vmatprep.subr.mxu0 0.0
        %671 = vmatpush1.msra.mxu0 %v256
        %672 = vmatprep.subr.mxu0 0.0
        %673 = vmatpush1.msra.mxu0 0.0
        %674 = vmatprep.subr.mxu0 0.0
        %675 = vmatpush1.msra.mxu0 0.0
        %676 = vmatprep.subr.mxu0 0.0
        %677 = vmatpush1.msra.mxu0 0.0
        %678 = vmatprep.subr.mxu0 0.0
        %679 = vmatpush1.msra.mxu0 0.0
        %680 = vmatprep.subr.mxu0 0.0
        %681 = vmatpush1.msra.mxu0 0.0
        %682 = vmatprep.subr.mxu0 0.0
        %683 = vmatpush1.msra.mxu0 0.0
        %684 = vmatprep.subr.mxu0 0.0
        %685 = vmatpush1.msra.mxu0 0.0
        %686 = vmatprep.subr.mxu0 0.0
        %687 = vmatpush1.msra.mxu0 0.0
        %688 = vmatprep.subr.mxu0 0.0
        %689 = vmatpush1.msra.mxu0 0.0
        %690 = vmatprep.subr.mxu0 0.0
        %691 = vmatpush1.msra.mxu0 0.0
        %692 = vmatprep.subr.mxu0 0.0
        %693 = vmatpush1.msra.mxu0 0.0
        %694 = vmatprep.subr.mxu0 0.0
        %695 = vmatpush1.msra.mxu0 0.0
        %696 = vmatprep.subr.mxu0 0.0
        %697 = vmatpush1.msra.mxu0 0.0
        %698 = vmatprep.subr.mxu0 0.0
        %699 = vmatpush1.msra.mxu0 0.0
        %700 = vmatprep.subr.mxu0 0.0
        %701 = vmatpush1.msra.mxu0 0.0
        %702 = vmatprep.subr.mxu0 0.0
        %703 = vmatpush1.msra.mxu0 0.0
        %704 = vmatprep.subr.mxu0 0.0
        %705 = vmatpush1.msra.mxu0 0.0
        %706 = vmatprep.subr.mxu0 0.0
        %707 = vmatpush1.msra.mxu0 0.0
        %708 = vmatprep.subr.mxu0 0.0
        %709 = vmatpush1.msra.mxu0 0.0
        %710 = vmatprep.subr.mxu0 0.0
        %711 = vmatpush1.msra.mxu0 0.0
        %712 = vmatprep.subr.mxu0 0.0
        %713 = vmatpush1.msra.mxu0 0.0
        %714 = vmatprep.subr.mxu0 0.0
        %715 = vmatpush1.msra.mxu0 0.0
        %716 = vmatprep.subr.mxu0 0.0
        %717 = vmatpush1.msra.mxu0 0.0
        %718 = vmatprep.subr.mxu0 0.0
        %719 = vmatpush1.msra.mxu0 0.0
        %720 = vmatprep.subr.mxu0 0.0
        %721 = vmatpush1.msra.mxu0 0.0
        %722 = vmatprep.subr.mxu0 0.0
        %723 = vmatpush1.msra.mxu0 0.0
        %724 = vmatprep.subr.mxu0 0.0
        %725 = vmatpush1.msra.mxu0 0.0
        %726 = vmatprep.subr.mxu0 0.0
        %727 = vmatpush1.msra.mxu0 0.0
        %728 = vmatprep.subr.mxu0 0.0
        %729 = vmatpush1.msra.mxu0 0.0
        %730 = vmatprep.subr.mxu0 0.0
        %731 = vmatpush1.msra.mxu0 0.0
        %732 = vmatprep.subr.mxu0 0.0
        %733 = vmatpush1.msra.mxu0 0.0
        %734 = vmatprep.mubr.f32.mxu0 0.0
        %735 = vmatmul.mubr.f32.gmra.mrb[0].mxu0 %v668
        %v736 = vpop.f32.mrb[0].mxu0
        %v737 = vadd.f32 0.0, %v736
        %v738 = vpop.f32.mrb[0].mxu0
        %739 = vdwg.mxu0
        %v740 = vadd.f32 %v254, -1.0
        %v741 = vadd.f32 %v740, %v520
        %v742 = vlaneseq
        %v743 = vshrl.u32 %v742, 7
        %v744 = vsub.s32 0, %v743
        %v745 = vrot.slane %v741, %v744
        %v746 = vsub.f32 %v745, %v250
        %v747 = vsub.f32 %v745, %v251
        %v748 = vand.u32 2147483647, %v746
        %v749 = vand.u32 2147483647, %v747
        %v750 = vsub.f32 1.0, %v748
        %v751 = vsub.f32 1.0, %v749
        %v752 = vmax.f32 %v750, 0.0
        %v753 = vmax.f32 %v751, 0.0
        %vm754 = vcmask 130048
        %755 = vst.msk [vmem:[#allocation2] sm:$0xff] %vm754, %v752
        %756 = vst.msk [vmem:[#allocation2 + $0x8] sm:$0xff] %vm754, %v753
        %v757 = vadd.f32 %v254, 0.0
        %v758 = vadd.f32 %v757, %v520
        %v759 = vlaneseq
        %v760 = vshrl.u32 %v759, 7
        %v761 = vsub.s32 1, %v760
        %v762 = vrot.slane %v758, %v761
        %v763 = vsub.f32 %v762, %v250
        %v764 = vsub.f32 %v762, %v251
        %v765 = vand.u32 2147483647, %v763
        %v766 = vand.u32 2147483647, %v764
        %v767 = vsub.f32 1.0, %v765
        %v768 = vsub.f32 1.0, %v766
        %v769 = vmax.f32 %v767, 0.0
        %v770 = vmax.f32 %v768, 0.0
        %771 = vst.msk [vmem:[#allocation2 + $0x10] sm:$0xff] %vm754, %v769
        %772 = vst.msk [vmem:[#allocation2 + $0x18] sm:$0xff] %vm754, %v770
        %v773 = vadd.f32 %v254, 1.0
        %v774 = vadd.f32 %v773, %v520
        %v775 = vlaneseq
        %v776 = vshrl.u32 %v775, 7
        %v777 = vsub.s32 2, %v776
        %v778 = vrot.slane %v774, %v777
        %v779 = vsub.f32 %v778, %v250
        %v780 = vsub.f32 %v778, %v251
        %v781 = vand.u32 2147483647, %v779
        %v782 = vand.u32 2147483647, %v780
        %v783 = vsub.f32 1.0, %v781
        %v784 = vsub.f32 1.0, %v782
        %v785 = vmax.f32 %v783, 0.0
        %v786 = vmax.f32 %v784, 0.0
        %787 = vst.msk [vmem:[#allocation2 + $0x20] sm:$0xff] %vm754, %v785
        %788 = vst.msk [vmem:[#allocation2 + $0x28] sm:$0xff] %vm754, %v786
        %790 = vrot.lane.b32.xlu0 %v664, 16
        %v791 = vpop.permute.xlu0 %790
        %794 = vrot.lane.b32.xlu0 %v737, 32
        %v795 = vpop.permute.xlu0 %794
        %v797 = vsel %vm754, %v591, %v791
        %vm798 = vcmask 261120
        %v799 = vsel %vm798, %v797, %v795
        %v800 = vld [vmem:[#allocation2] sm:$0xff]
        %v801 = vld [vmem:[#allocation2 + $0x8] sm:$0xff]
        %v802 = vld [vmem:[#allocation2 + $0x10] sm:$0xff]
        %v803 = vld [vmem:[#allocation2 + $0x18] sm:$0xff]
        %v804 = vld [vmem:[#allocation2 + $0x20] sm:$0xff]
        %v805 = vld [vmem:[#allocation2 + $0x28] sm:$0xff]
        %807 = vset.pattern.permute.xlu0 0
        %808 = vperm.xlu0 %807, %v258
        %v809 = vpop.permute.xlu0 %808
        %vm810 = vcmask 1044480
        %v811 = vrot.slane %v518, 3
        %v812 = vrot.slane %v809, 3
        %v813 = vsel %vm810, %v811, %v812
        %vm815 = vcmask 392192
        %v817 = vsel %vm815, %v799, 0
        %819 = vmatprep.subr.mxu0 0.0
        %820 = vmatpush1.msra.mxu0 %v800
        %821 = vmatprep.subr.mxu0 0.0
        %822 = vmatpush1.msra.mxu0 %v801
        %823 = vmatprep.subr.mxu0 0.0
        %824 = vmatpush1.msra.mxu0 %v802
        %825 = vmatprep.subr.mxu0 0.0
        %826 = vmatpush1.msra.mxu0 %v803
        %827 = vmatprep.subr.mxu0 0.0
        %828 = vmatpush1.msra.mxu0 %v804
        %829 = vmatprep.subr.mxu0 0.0
        %830 = vmatpush1.msra.mxu0 %v805
        %831 = vmatprep.subr.mxu0 0.0
        %832 = vmatpush1.msra.mxu0 0.0
        %833 = vmatprep.subr.mxu0 0.0
        %834 = vmatpush1.msra.mxu0 0.0
        %835 = vmatprep.subr.mxu0 0.0
        %836 = vmatpush1.msra.mxu0 0.0
        %837 = vmatprep.subr.mxu0 0.0
        %838 = vmatpush1.msra.mxu0 0.0
        %839 = vmatprep.subr.mxu0 0.0
        %840 = vmatpush1.msra.mxu0 0.0
        %841 = vmatprep.subr.mxu0 0.0
        %842 = vmatpush1.msra.mxu0 0.0
        %843 = vmatprep.subr.mxu0 0.0
        %844 = vmatpush1.msra.mxu0 0.0
        %845 = vmatprep.subr.mxu0 0.0
        %846 = vmatpush1.msra.mxu0 0.0
        %847 = vmatprep.subr.mxu0 0.0
        %848 = vmatpush1.msra.mxu0 0.0
        %849 = vmatprep.subr.mxu0 0.0
        %850 = vmatpush1.msra.mxu0 0.0
        %851 = vmatprep.subr.mxu0 0.0
        %852 = vmatpush1.msra.mxu0 0.0
        %853 = vmatprep.subr.mxu0 0.0
        %854 = vmatpush1.msra.mxu0 0.0
        %855 = vmatprep.subr.mxu0 0.0
        %856 = vmatpush1.msra.mxu0 0.0
        %857 = vmatprep.subr.mxu0 0.0
        %858 = vmatpush1.msra.mxu0 0.0
        %859 = vmatprep.subr.mxu0 0.0
        %860 = vmatpush1.msra.mxu0 0.0
        %861 = vmatprep.subr.mxu0 0.0
        %862 = vmatpush1.msra.mxu0 0.0
        %863 = vmatprep.subr.mxu0 0.0
        %864 = vmatpush1.msra.mxu0 0.0
        %865 = vmatprep.subr.mxu0 0.0
        %866 = vmatpush1.msra.mxu0 0.0
        %867 = vmatprep.subr.mxu0 0.0
        %868 = vmatpush1.msra.mxu0 0.0
        %869 = vmatprep.subr.mxu0 0.0
        %870 = vmatpush1.msra.mxu0 0.0
        %871 = vmatprep.subr.mxu0 0.0
        %872 = vmatpush1.msra.mxu0 0.0
        %873 = vmatprep.subr.mxu0 0.0
        %874 = vmatpush1.msra.mxu0 0.0
        %875 = vmatprep.subr.mxu0 0.0
        %876 = vmatpush1.msra.mxu0 0.0
        %877 = vmatprep.subr.mxu0 0.0
        %878 = vmatpush1.msra.mxu0 0.0
        %879 = vmatprep.subr.mxu0 0.0
        %880 = vmatpush1.msra.mxu0 0.0
        %881 = vmatprep.subr.mxu0 0.0
        %882 = vmatpush1.msra.mxu0 0.0
        %883 = vmatprep.mubr.f32.mxu0 0.0
        %884 = vmatmul.mubr.f32.gmra.mrb[0].mxu0 %v817
        %v885 = vpop.f32.mrb[0].mxu0
        %v886 = vadd.f32 %v813, %v885
        %v887 = vpop.f32.mrb[0].mxu0
        %888 = vdwg.mxu0
        %s889 = scalar_lea.vmem %s4, 16
        %v890 = vld [vmem:[%s889] sm:$0xff]
        %v891 = vld [vmem:[%s889 + $0x8] sm:$0x7]
        %s892 = scalar_lea.vmem %s2, 4
        %v893 = vld [vmem:[%s892] sm:$0x7]
        %s894 = scalar_lea.vmem %s3, 24
        %v895 = vld [vmem:[%s894] sm:$0xff]
        %v896 = vld [vmem:[%s894 + $0x8] sm:$0xff]
        %v897 = vld [vmem:[%s894 + $0x10] sm:$0xff]
        %v899 = vsel %vm263, %v893, 0
        %901 = vmatprep.subr.mxu0 0.0
        %902 = vmatpush1.msra.mxu0 %v886
        %903 = vmatprep.subr.mxu0 0.0
        %904 = vmatpush1.msra.mxu0 0.0
        %905 = vmatprep.subr.mxu0 0.0
        %906 = vmatpush1.msra.mxu0 0.0
        %907 = vmatprep.subr.mxu0 0.0
        %908 = vmatpush1.msra.mxu0 0.0
        %909 = vmatprep.subr.mxu0 0.0
        %910 = vmatpush1.msra.mxu0 0.0
        %911 = vmatprep.subr.mxu0 0.0
        %912 = vmatpush1.msra.mxu0 0.0
        %913 = vmatprep.subr.mxu0 0.0
        %914 = vmatpush1.msra.mxu0 0.0
        %915 = vmatprep.subr.mxu0 0.0
        %916 = vmatpush1.msra.mxu0 0.0
        %917 = vmatprep.subr.mxu0 0.0
        %918 = vmatpush1.msra.mxu0 0.0
        %919 = vmatprep.subr.mxu0 0.0
        %920 = vmatpush1.msra.mxu0 0.0
        %921 = vmatprep.subr.mxu0 0.0
        %922 = vmatpush1.msra.mxu0 0.0
        %923 = vmatprep.subr.mxu0 0.0
        %924 = vmatpush1.msra.mxu0 0.0
        %925 = vmatprep.subr.mxu0 0.0
        %926 = vmatpush1.msra.mxu0 0.0
        %927 = vmatprep.subr.mxu0 0.0
        %928 = vmatpush1.msra.mxu0 0.0
        %929 = vmatprep.subr.mxu0 0.0
        %930 = vmatpush1.msra.mxu0 0.0
        %931 = vmatprep.subr.mxu0 0.0
        %932 = vmatpush1.msra.mxu0 0.0
        %933 = vmatprep.subr.mxu0 0.0
        %934 = vmatpush1.msra.mxu0 0.0
        %935 = vmatprep.subr.mxu0 0.0
        %936 = vmatpush1.msra.mxu0 0.0
        %937 = vmatprep.subr.mxu0 0.0
        %938 = vmatpush1.msra.mxu0 0.0
        %939 = vmatprep.subr.mxu0 0.0
        %940 = vmatpush1.msra.mxu0 0.0
        %941 = vmatprep.subr.mxu0 0.0
        %942 = vmatpush1.msra.mxu0 0.0
        %943 = vmatprep.subr.mxu0 0.0
        %944 = vmatpush1.msra.mxu0 0.0
        %945 = vmatprep.subr.mxu0 0.0
        %946 = vmatpush1.msra.mxu0 0.0
        %947 = vmatprep.subr.mxu0 0.0
        %948 = vmatpush1.msra.mxu0 0.0
        %949 = vmatprep.subr.mxu0 0.0
        %950 = vmatpush1.msra.mxu0 0.0
        %951 = vmatprep.subr.mxu0 0.0
        %952 = vmatpush1.msra.mxu0 0.0
        %953 = vmatprep.subr.mxu0 0.0
        %954 = vmatpush1.msra.mxu0 0.0
        %955 = vmatprep.subr.mxu0 0.0
        %956 = vmatpush1.msra.mxu0 0.0
        %957 = vmatprep.subr.mxu0 0.0
        %958 = vmatpush1.msra.mxu0 0.0
        %959 = vmatprep.subr.mxu0 0.0
        %960 = vmatpush1.msra.mxu0 0.0
        %961 = vmatprep.subr.mxu0 0.0
        %962 = vmatpush1.msra.mxu0 0.0
        %963 = vmatprep.subr.mxu0 0.0
        %964 = vmatpush1.msra.mxu0 0.0
        %965 = vmatprep.mubr.f32.mxu0 0.0
        %966 = vmatmul.mubr.f32.gmra.mrb[0].mxu0 %v899
        %v967 = vpop.f32.mrb[0].mxu0
        %v968 = vadd.f32 0.0, %v967
        %v969 = vpop.f32.mrb[0].mxu0
        %970 = vdwg.mxu0
        %972 = vrot.lane.b32.xlu0 %v968, 1
        %v973 = vpop.permute.xlu0 %972
        %v975 = vsel %vm341, 0.0, %v973
        %v976 = vmul.f32 %v975, %v346
        %v977 = vadd.f32 %v976, 0.0
        %978 = vrot.lane.b32.xlu0 %v893, 120
        %v979 = vpop.permute.xlu0 %978
        %v980 = vsel %vm263, %v979, 0
        %982 = vmatprep.subr.mxu0 0.0
        %983 = vmatpush1.msra.mxu0 %v886
        %984 = vmatprep.subr.mxu0 0.0
        %985 = vmatpush1.msra.mxu0 0.0
        %986 = vmatprep.subr.mxu0 0.0
        %987 = vmatpush1.msra.mxu0 0.0
        %988 = vmatprep.subr.mxu0 0.0
        %989 = vmatpush1.msra.mxu0 0.0
        %990 = vmatprep.subr.mxu0 0.0
        %991 = vmatpush1.msra.mxu0 0.0
        %992 = vmatprep.subr.mxu0 0.0
        %993 = vmatpush1.msra.mxu0 0.0
        %994 = vmatprep.subr.mxu0 0.0
        %995 = vmatpush1.msra.mxu0 0.0
        %996 = vmatprep.subr.mxu0 0.0
        %997 = vmatpush1.msra.mxu0 0.0
        %998 = vmatprep.subr.mxu0 0.0
        %999 = vmatpush1.msra.mxu0 0.0
        %1000 = vmatprep.subr.mxu0 0.0
        %1001 = vmatpush1.msra.mxu0 0.0
        %1002 = vmatprep.subr.mxu0 0.0
        %1003 = vmatpush1.msra.mxu0 0.0
        %1004 = vmatprep.subr.mxu0 0.0
        %1005 = vmatpush1.msra.mxu0 0.0
        %1006 = vmatprep.subr.mxu0 0.0
        %1007 = vmatpush1.msra.mxu0 0.0
        %1008 = vmatprep.subr.mxu0 0.0
        %1009 = vmatpush1.msra.mxu0 0.0
        %1010 = vmatprep.subr.mxu0 0.0
        %1011 = vmatpush1.msra.mxu0 0.0
        %1012 = vmatprep.subr.mxu0 0.0
        %1013 = vmatpush1.msra.mxu0 0.0
        %1014 = vmatprep.subr.mxu0 0.0
        %1015 = vmatpush1.msra.mxu0 0.0
        %1016 = vmatprep.subr.mxu0 0.0
        %1017 = vmatpush1.msra.mxu0 0.0
        %1018 = vmatprep.subr.mxu0 0.0
        %1019 = vmatpush1.msra.mxu0 0.0
        %1020 = vmatprep.subr.mxu0 0.0
        %1021 = vmatpush1.msra.mxu0 0.0
        %1022 = vmatprep.subr.mxu0 0.0
        %1023 = vmatpush1.msra.mxu0 0.0
        %1024 = vmatprep.subr.mxu0 0.0
        %1025 = vmatpush1.msra.mxu0 0.0
        %1026 = vmatprep.subr.mxu0 0.0
        %1027 = vmatpush1.msra.mxu0 0.0
        %1028 = vmatprep.subr.mxu0 0.0
        %1029 = vmatpush1.msra.mxu0 0.0
        %1030 = vmatprep.subr.mxu0 0.0
        %1031 = vmatpush1.msra.mxu0 0.0
        %1032 = vmatprep.subr.mxu0 0.0
        %1033 = vmatpush1.msra.mxu0 0.0
        %1034 = vmatprep.subr.mxu0 0.0
        %1035 = vmatpush1.msra.mxu0 0.0
        %1036 = vmatprep.subr.mxu0 0.0
        %1037 = vmatpush1.msra.mxu0 0.0
        %1038 = vmatprep.subr.mxu0 0.0
        %1039 = vmatpush1.msra.mxu0 0.0
        %1040 = vmatprep.subr.mxu0 0.0
        %1041 = vmatpush1.msra.mxu0 0.0
        %1042 = vmatprep.subr.mxu0 0.0
        %1043 = vmatpush1.msra.mxu0 0.0
        %1044 = vmatprep.subr.mxu0 0.0
        %1045 = vmatpush1.msra.mxu0 0.0
        %1046 = vmatprep.mubr.f32.mxu0 0.0
        %1047 = vmatmul.mubr.f32.gmra.mrb[0].mxu0 %v980
        %v1048 = vpop.f32.mrb[0].mxu0
        %v1049 = vadd.f32 0.0, %v1048
        %v1050 = vpop.f32.mrb[0].mxu0
        %1051 = vdwg.mxu0
        %v1052 = vmul.f32 %v1049, %v426
        %v1053 = vadd.f32 %v977, %v1052
        %1054 = vrot.lane.b32.xlu0 %v893, 112
        %v1055 = vpop.permute.xlu0 %1054
        %v1056 = vsel %vm263, %v1055, 0
        %1058 = vmatprep.subr.mxu0 0.0
        %1059 = vmatpush1.msra.mxu0 %v886
        %1060 = vmatprep.subr.mxu0 0.0
        %1061 = vmatpush1.msra.mxu0 0.0
        %1062 = vmatprep.subr.mxu0 0.0
        %1063 = vmatpush1.msra.mxu0 0.0
        %1064 = vmatprep.subr.mxu0 0.0
        %1065 = vmatpush1.msra.mxu0 0.0
        %1066 = vmatprep.subr.mxu0 0.0
        %1067 = vmatpush1.msra.mxu0 0.0
        %1068 = vmatprep.subr.mxu0 0.0
        %1069 = vmatpush1.msra.mxu0 0.0
        %1070 = vmatprep.subr.mxu0 0.0
        %1071 = vmatpush1.msra.mxu0 0.0
        %1072 = vmatprep.subr.mxu0 0.0
        %1073 = vmatpush1.msra.mxu0 0.0
        %1074 = vmatprep.subr.mxu0 0.0
        %1075 = vmatpush1.msra.mxu0 0.0
        %1076 = vmatprep.subr.mxu0 0.0
        %1077 = vmatpush1.msra.mxu0 0.0
        %1078 = vmatprep.subr.mxu0 0.0
        %1079 = vmatpush1.msra.mxu0 0.0
        %1080 = vmatprep.subr.mxu0 0.0
        %1081 = vmatpush1.msra.mxu0 0.0
        %1082 = vmatprep.subr.mxu0 0.0
        %1083 = vmatpush1.msra.mxu0 0.0
        %1084 = vmatprep.subr.mxu0 0.0
        %1085 = vmatpush1.msra.mxu0 0.0
        %1086 = vmatprep.subr.mxu0 0.0
        %1087 = vmatpush1.msra.mxu0 0.0
        %1088 = vmatprep.subr.mxu0 0.0
        %1089 = vmatpush1.msra.mxu0 0.0
        %1090 = vmatprep.subr.mxu0 0.0
        %1091 = vmatpush1.msra.mxu0 0.0
        %1092 = vmatprep.subr.mxu0 0.0
        %1093 = vmatpush1.msra.mxu0 0.0
        %1094 = vmatprep.subr.mxu0 0.0
        %1095 = vmatpush1.msra.mxu0 0.0
        %1096 = vmatprep.subr.mxu0 0.0
        %1097 = vmatpush1.msra.mxu0 0.0
        %1098 = vmatprep.subr.mxu0 0.0
        %1099 = vmatpush1.msra.mxu0 0.0
        %1100 = vmatprep.subr.mxu0 0.0
        %1101 = vmatpush1.msra.mxu0 0.0
        %1102 = vmatprep.subr.mxu0 0.0
        %1103 = vmatpush1.msra.mxu0 0.0
        %1104 = vmatprep.subr.mxu0 0.0
        %1105 = vmatpush1.msra.mxu0 0.0
        %1106 = vmatprep.subr.mxu0 0.0
        %1107 = vmatpush1.msra.mxu0 0.0
        %1108 = vmatprep.subr.mxu0 0.0
        %1109 = vmatpush1.msra.mxu0 0.0
        %1110 = vmatprep.subr.mxu0 0.0
        %1111 = vmatpush1.msra.mxu0 0.0
        %1112 = vmatprep.subr.mxu0 0.0
        %1113 = vmatpush1.msra.mxu0 0.0
        %1114 = vmatprep.subr.mxu0 0.0
        %1115 = vmatpush1.msra.mxu0 0.0
        %1116 = vmatprep.subr.mxu0 0.0
        %1117 = vmatpush1.msra.mxu0 0.0
        %1118 = vmatprep.subr.mxu0 0.0
        %1119 = vmatpush1.msra.mxu0 0.0
        %1120 = vmatprep.subr.mxu0 0.0
        %1121 = vmatpush1.msra.mxu0 0.0
        %1122 = vmatprep.mubr.f32.mxu0 0.0
        %1123 = vmatmul.mubr.f32.gmra.mrb[0].mxu0 %v1056
        %v1124 = vpop.f32.mrb[0].mxu0
        %v1125 = vadd.f32 0.0, %v1124
        %v1126 = vpop.f32.mrb[0].mxu0
        %1127 = vdwg.mxu0
        %1129 = vrot.lane.b32.xlu0 %v1125, 127
        %v1130 = vpop.permute.xlu0 %1129
        %v1132 = vsel %vm507, %v1130, 0.0
        %v1133 = vmul.f32 %v1132, %v512
        %v1134 = vadd.f32 %v1053, %v1133
        %1136 = vset.pattern.permute.xlu0 0
        %1137 = vperm.xlu0 %1136, %v890
        %v1138 = vpop.permute.xlu0 %1137
        %v1140 = vadd.f32 %v1134, %v1138
        %v1142 = vsel %vm263, %v895, 0
        %1144 = vmatprep.subr.mxu0 0.0
        %1145 = vmatpush1.msra.mxu0 %v886
        %1146 = vmatprep.subr.mxu0 0.0
        %1147 = vmatpush1.msra.mxu0 0.0
        %1148 = vmatprep.subr.mxu0 0.0
        %1149 = vmatpush1.msra.mxu0 0.0
        %1150 = vmatprep.subr.mxu0 0.0
        %1151 = vmatpush1.msra.mxu0 0.0
        %1152 = vmatprep.subr.mxu0 0.0
        %1153 = vmatpush1.msra.mxu0 0.0
        %1154 = vmatprep.subr.mxu0 0.0
        %1155 = vmatpush1.msra.mxu0 0.0
        %1156 = vmatprep.subr.mxu0 0.0
        %1157 = vmatpush1.msra.mxu0 0.0
        %1158 = vmatprep.subr.mxu0 0.0
        %1159 = vmatpush1.msra.mxu0 0.0
        %1160 = vmatprep.subr.mxu0 0.0
        %1161 = vmatpush1.msra.mxu0 0.0
        %1162 = vmatprep.subr.mxu0 0.0
        %1163 = vmatpush1.msra.mxu0 0.0
        %1164 = vmatprep.subr.mxu0 0.0
        %1165 = vmatpush1.msra.mxu0 0.0
        %1166 = vmatprep.subr.mxu0 0.0
        %1167 = vmatpush1.msra.mxu0 0.0
        %1168 = vmatprep.subr.mxu0 0.0
        %1169 = vmatpush1.msra.mxu0 0.0
        %1170 = vmatprep.subr.mxu0 0.0
        %1171 = vmatpush1.msra.mxu0 0.0
        %1172 = vmatprep.subr.mxu0 0.0
        %1173 = vmatpush1.msra.mxu0 0.0
        %1174 = vmatprep.subr.mxu0 0.0
        %1175 = vmatpush1.msra.mxu0 0.0
        %1176 = vmatprep.subr.mxu0 0.0
        %1177 = vmatpush1.msra.mxu0 0.0
        %1178 = vmatprep.subr.mxu0 0.0
        %1179 = vmatpush1.msra.mxu0 0.0
        %1180 = vmatprep.subr.mxu0 0.0
        %1181 = vmatpush1.msra.mxu0 0.0
        %1182 = vmatprep.subr.mxu0 0.0
        %1183 = vmatpush1.msra.mxu0 0.0
        %1184 = vmatprep.subr.mxu0 0.0
        %1185 = vmatpush1.msra.mxu0 0.0
        %1186 = vmatprep.subr.mxu0 0.0
        %1187 = vmatpush1.msra.mxu0 0.0
        %1188 = vmatprep.subr.mxu0 0.0
        %1189 = vmatpush1.msra.mxu0 0.0
        %1190 = vmatprep.subr.mxu0 0.0
        %1191 = vmatpush1.msra.mxu0 0.0
        %1192 = vmatprep.subr.mxu0 0.0
        %1193 = vmatpush1.msra.mxu0 0.0
        %1194 = vmatprep.subr.mxu0 0.0
        %1195 = vmatpush1.msra.mxu0 0.0
        %1196 = vmatprep.subr.mxu0 0.0
        %1197 = vmatpush1.msra.mxu0 0.0
        %1198 = vmatprep.subr.mxu0 0.0
        %1199 = vmatpush1.msra.mxu0 0.0
        %1200 = vmatprep.subr.mxu0 0.0
        %1201 = vmatpush1.msra.mxu0 0.0
        %1202 = vmatprep.subr.mxu0 0.0
        %1203 = vmatpush1.msra.mxu0 0.0
        %1204 = vmatprep.subr.mxu0 0.0
        %1205 = vmatpush1.msra.mxu0 0.0
        %1206 = vmatprep.subr.mxu0 0.0
        %1207 = vmatpush1.msra.mxu0 0.0
        %1208 = vmatprep.mubr.f32.mxu0 0.0
        %1209 = vmatmul.mubr.f32.gmra.mrb[0].mxu0 %v1142
        %v1210 = vpop.f32.mrb[0].mxu0
        %v1211 = vadd.f32 0.0, %v1210
        %v1212 = vpop.f32.mrb[0].mxu0
        %1213 = vdwg.mxu0
        %v1215 = vsel %vm263, %v896, 0
        %1217 = vmatprep.subr.mxu0 0.0
        %1218 = vmatpush1.msra.mxu0 %v886
        %1219 = vmatprep.subr.mxu0 0.0
        %1220 = vmatpush1.msra.mxu0 0.0
        %1221 = vmatprep.subr.mxu0 0.0
        %1222 = vmatpush1.msra.mxu0 0.0
        %1223 = vmatprep.subr.mxu0 0.0
        %1224 = vmatpush1.msra.mxu0 0.0
        %1225 = vmatprep.subr.mxu0 0.0
        %1226 = vmatpush1.msra.mxu0 0.0
        %1227 = vmatprep.subr.mxu0 0.0
        %1228 = vmatpush1.msra.mxu0 0.0
        %1229 = vmatprep.subr.mxu0 0.0
        %1230 = vmatpush1.msra.mxu0 0.0
        %1231 = vmatprep.subr.mxu0 0.0
        %1232 = vmatpush1.msra.mxu0 0.0
        %1233 = vmatprep.subr.mxu0 0.0
        %1234 = vmatpush1.msra.mxu0 0.0
        %1235 = vmatprep.subr.mxu0 0.0
        %1236 = vmatpush1.msra.mxu0 0.0
        %1237 = vmatprep.subr.mxu0 0.0
        %1238 = vmatpush1.msra.mxu0 0.0
        %1239 = vmatprep.subr.mxu0 0.0
        %1240 = vmatpush1.msra.mxu0 0.0
        %1241 = vmatprep.subr.mxu0 0.0
        %1242 = vmatpush1.msra.mxu0 0.0
        %1243 = vmatprep.subr.mxu0 0.0
        %1244 = vmatpush1.msra.mxu0 0.0
        %1245 = vmatprep.subr.mxu0 0.0
        %1246 = vmatpush1.msra.mxu0 0.0
        %1247 = vmatprep.subr.mxu0 0.0
        %1248 = vmatpush1.msra.mxu0 0.0
        %1249 = vmatprep.subr.mxu0 0.0
        %1250 = vmatpush1.msra.mxu0 0.0
        %1251 = vmatprep.subr.mxu0 0.0
        %1252 = vmatpush1.msra.mxu0 0.0
        %1253 = vmatprep.subr.mxu0 0.0
        %1254 = vmatpush1.msra.mxu0 0.0
        %1255 = vmatprep.subr.mxu0 0.0
        %1256 = vmatpush1.msra.mxu0 0.0
        %1257 = vmatprep.subr.mxu0 0.0
        %1258 = vmatpush1.msra.mxu0 0.0
        %1259 = vmatprep.subr.mxu0 0.0
        %1260 = vmatpush1.msra.mxu0 0.0
        %1261 = vmatprep.subr.mxu0 0.0
        %1262 = vmatpush1.msra.mxu0 0.0
        %1263 = vmatprep.subr.mxu0 0.0
        %1264 = vmatpush1.msra.mxu0 0.0
        %1265 = vmatprep.subr.mxu0 0.0
        %1266 = vmatpush1.msra.mxu0 0.0
        %1267 = vmatprep.subr.mxu0 0.0
        %1268 = vmatpush1.msra.mxu0 0.0
        %1269 = vmatprep.subr.mxu0 0.0
        %1270 = vmatpush1.msra.mxu0 0.0
        %1271 = vmatprep.subr.mxu0 0.0
        %1272 = vmatpush1.msra.mxu0 0.0
        %1273 = vmatprep.subr.mxu0 0.0
        %1274 = vmatpush1.msra.mxu0 0.0
        %1275 = vmatprep.subr.mxu0 0.0
        %1276 = vmatpush1.msra.mxu0 0.0
        %1277 = vmatprep.subr.mxu0 0.0
        %1278 = vmatpush1.msra.mxu0 0.0
        %1279 = vmatprep.subr.mxu0 0.0
        %1280 = vmatpush1.msra.mxu0 0.0
        %1281 = vmatprep.mubr.f32.mxu0 0.0
        %1282 = vmatmul.mubr.f32.gmra.mrb[0].mxu0 %v1215
        %v1283 = vpop.f32.mrb[0].mxu0
        %v1284 = vadd.f32 0.0, %v1283
        %v1285 = vpop.f32.mrb[0].mxu0
        %1286 = vdwg.mxu0
        %v1288 = vsel %vm263, %v897, 0
        %1290 = vmatprep.subr.mxu0 0.0
        %1291 = vmatpush1.msra.mxu0 %v886
        %1292 = vmatprep.subr.mxu0 0.0
        %1293 = vmatpush1.msra.mxu0 0.0
        %1294 = vmatprep.subr.mxu0 0.0
        %1295 = vmatpush1.msra.mxu0 0.0
        %1296 = vmatprep.subr.mxu0 0.0
        %1297 = vmatpush1.msra.mxu0 0.0
        %1298 = vmatprep.subr.mxu0 0.0
        %1299 = vmatpush1.msra.mxu0 0.0
        %1300 = vmatprep.subr.mxu0 0.0
        %1301 = vmatpush1.msra.mxu0 0.0
        %1302 = vmatprep.subr.mxu0 0.0
        %1303 = vmatpush1.msra.mxu0 0.0
        %1304 = vmatprep.subr.mxu0 0.0
        %1305 = vmatpush1.msra.mxu0 0.0
        %1306 = vmatprep.subr.mxu0 0.0
        %1307 = vmatpush1.msra.mxu0 0.0
        %1308 = vmatprep.subr.mxu0 0.0
        %1309 = vmatpush1.msra.mxu0 0.0
        %1310 = vmatprep.subr.mxu0 0.0
        %1311 = vmatpush1.msra.mxu0 0.0
        %1312 = vmatprep.subr.mxu0 0.0
        %1313 = vmatpush1.msra.mxu0 0.0
        %1314 = vmatprep.subr.mxu0 0.0
        %1315 = vmatpush1.msra.mxu0 0.0
        %1316 = vmatprep.subr.mxu0 0.0
        %1317 = vmatpush1.msra.mxu0 0.0
        %1318 = vmatprep.subr.mxu0 0.0
        %1319 = vmatpush1.msra.mxu0 0.0
        %1320 = vmatprep.subr.mxu0 0.0
        %1321 = vmatpush1.msra.mxu0 0.0
        %1322 = vmatprep.subr.mxu0 0.0
        %1323 = vmatpush1.msra.mxu0 0.0
        %1324 = vmatprep.subr.mxu0 0.0
        %1325 = vmatpush1.msra.mxu0 0.0
        %1326 = vmatprep.subr.mxu0 0.0
        %1327 = vmatpush1.msra.mxu0 0.0
        %1328 = vmatprep.subr.mxu0 0.0
        %1329 = vmatpush1.msra.mxu0 0.0
        %1330 = vmatprep.subr.mxu0 0.0
        %1331 = vmatpush1.msra.mxu0 0.0
        %1332 = vmatprep.subr.mxu0 0.0
        %1333 = vmatpush1.msra.mxu0 0.0
        %1334 = vmatprep.subr.mxu0 0.0
        %1335 = vmatpush1.msra.mxu0 0.0
        %1336 = vmatprep.subr.mxu0 0.0
        %1337 = vmatpush1.msra.mxu0 0.0
        %1338 = vmatprep.subr.mxu0 0.0
        %1339 = vmatpush1.msra.mxu0 0.0
        %1340 = vmatprep.subr.mxu0 0.0
        %1341 = vmatpush1.msra.mxu0 0.0
        %1342 = vmatprep.subr.mxu0 0.0
        %1343 = vmatpush1.msra.mxu0 0.0
        %1344 = vmatprep.subr.mxu0 0.0
        %1345 = vmatpush1.msra.mxu0 0.0
        %1346 = vmatprep.subr.mxu0 0.0
        %1347 = vmatpush1.msra.mxu0 0.0
        %1348 = vmatprep.subr.mxu0 0.0
        %1349 = vmatpush1.msra.mxu0 0.0
        %1350 = vmatprep.subr.mxu0 0.0
        %1351 = vmatpush1.msra.mxu0 0.0
        %1352 = vmatprep.subr.mxu0 0.0
        %1353 = vmatpush1.msra.mxu0 0.0
        %1354 = vmatprep.mubr.f32.mxu0 0.0
        %1355 = vmatmul.mubr.f32.gmra.mrb[0].mxu0 %v1288
        %v1356 = vpop.f32.mrb[0].mxu0
        %v1357 = vadd.f32 0.0, %v1356
        %v1358 = vpop.f32.mrb[0].mxu0
        %1359 = vdwg.mxu0
        %v1360 = vadd.f32 %v740, %v1140
        %v1361 = vlaneseq
        %v1362 = vshrl.u32 %v1361, 7
        %v1363 = vsub.s32 0, %v1362
        %v1364 = vrot.slane %v1360, %v1363
        %v1365 = vsub.f32 %v1364, %v250
        %v1366 = vsub.f32 %v1364, %v251
        %v1367 = vand.u32 2147483647, %v1365
        %v1368 = vand.u32 2147483647, %v1366
        %v1369 = vsub.f32 1.0, %v1367
        %v1370 = vsub.f32 1.0, %v1368
        %v1371 = vmax.f32 %v1369, 0.0
        %v1372 = vmax.f32 %v1370, 0.0
        %1373 = vst.msk [vmem:[#allocation2] sm:$0xff] %vm754, %v1371
        %1374 = vst.msk [vmem:[#allocation2 + $0x8] sm:$0xff] %vm754, %v1372
        %v1375 = vadd.f32 %v757, %v1140
        %v1376 = vlaneseq
        %v1377 = vshrl.u32 %v1376, 7
        %v1378 = vsub.s32 1, %v1377
        %v1379 = vrot.slane %v1375, %v1378
        %v1380 = vsub.f32 %v1379, %v250
        %v1381 = vsub.f32 %v1379, %v251
        %v1382 = vand.u32 2147483647, %v1380
        %v1383 = vand.u32 2147483647, %v1381
        %v1384 = vsub.f32 1.0, %v1382
        %v1385 = vsub.f32 1.0, %v1383
        %v1386 = vmax.f32 %v1384, 0.0
        %v1387 = vmax.f32 %v1385, 0.0
        %1388 = vst.msk [vmem:[#allocation2 + $0x10] sm:$0xff] %vm754, %v1386
        %1389 = vst.msk [vmem:[#allocation2 + $0x18] sm:$0xff] %vm754, %v1387
        %v1390 = vadd.f32 %v773, %v1140
        %v1391 = vlaneseq
        %v1392 = vshrl.u32 %v1391, 7
        %v1393 = vsub.s32 2, %v1392
        %v1394 = vrot.slane %v1390, %v1393
        %v1395 = vsub.f32 %v1394, %v250
        %v1396 = vsub.f32 %v1394, %v251
        %v1397 = vand.u32 2147483647, %v1395
        %v1398 = vand.u32 2147483647, %v1396
        %v1399 = vsub.f32 1.0, %v1397
        %v1400 = vsub.f32 1.0, %v1398
        %v1401 = vmax.f32 %v1399, 0.0
        %v1402 = vmax.f32 %v1400, 0.0
        %1403 = vst.msk [vmem:[#allocation2 + $0x20] sm:$0xff] %vm754, %v1401
        %1404 = vst.msk [vmem:[#allocation2 + $0x28] sm:$0xff] %vm754, %v1402
        %1406 = vrot.lane.b32.xlu0 %v1284, 16
        %v1407 = vpop.permute.xlu0 %1406
        %1410 = vrot.lane.b32.xlu0 %v1357, 32
        %v1411 = vpop.permute.xlu0 %1410
        %v1413 = vsel %vm754, %v1211, %v1407
        %v1414 = vsel %vm798, %v1413, %v1411
        %v1415 = vld [vmem:[#allocation2] sm:$0xff]
        %v1416 = vld [vmem:[#allocation2 + $0x8] sm:$0xff]
        %v1417 = vld [vmem:[#allocation2 + $0x10] sm:$0xff]
        %v1418 = vld [vmem:[#allocation2 + $0x18] sm:$0xff]
        %v1419 = vld [vmem:[#allocation2 + $0x20] sm:$0xff]
        %v1420 = vld [vmem:[#allocation2 + $0x28] sm:$0xff]
        %1422 = vset.pattern.permute.xlu0 0
        %1423 = vperm.xlu0 %1422, %v891
        %v1424 = vpop.permute.xlu0 %1423
        %v1425 = vrot.slane %v1138, 3
        %v1426 = vrot.slane %v1424, 3
        %v1427 = vsel %vm810, %v1425, %v1426
        %v1430 = vsel %vm815, %v1414, 0
        %1432 = vmatprep.subr.mxu0 0.0
        %1433 = vmatpush1.msra.mxu0 %v1415
        %1434 = vmatprep.subr.mxu0 0.0
        %1435 = vmatpush1.msra.mxu0 %v1416
        %1436 = vmatprep.subr.mxu0 0.0
        %1437 = vmatpush1.msra.mxu0 %v1417
        %1438 = vmatprep.subr.mxu0 0.0
        %1439 = vmatpush1.msra.mxu0 %v1418
        %1440 = vmatprep.subr.mxu0 0.0
        %1441 = vmatpush1.msra.mxu0 %v1419
        %1442 = vmatprep.subr.mxu0 0.0
        %1443 = vmatpush1.msra.mxu0 %v1420
        %1444 = vmatprep.subr.mxu0 0.0
        %1445 = vmatpush1.msra.mxu0 0.0
        %1446 = vmatprep.subr.mxu0 0.0
        %1447 = vmatpush1.msra.mxu0 0.0
        %1448 = vmatprep.subr.mxu0 0.0
        %1449 = vmatpush1.msra.mxu0 0.0
        %1450 = vmatprep.subr.mxu0 0.0
        %1451 = vmatpush1.msra.mxu0 0.0
        %1452 = vmatprep.subr.mxu0 0.0
        %1453 = vmatpush1.msra.mxu0 0.0
        %1454 = vmatprep.subr.mxu0 0.0
        %1455 = vmatpush1.msra.mxu0 0.0
        %1456 = vmatprep.subr.mxu0 0.0
        %1457 = vmatpush1.msra.mxu0 0.0
        %1458 = vmatprep.subr.mxu0 0.0
        %1459 = vmatpush1.msra.mxu0 0.0
        %1460 = vmatprep.subr.mxu0 0.0
        %1461 = vmatpush1.msra.mxu0 0.0
        %1462 = vmatprep.subr.mxu0 0.0
        %1463 = vmatpush1.msra.mxu0 0.0
        %1464 = vmatprep.subr.mxu0 0.0
        %1465 = vmatpush1.msra.mxu0 0.0
        %1466 = vmatprep.subr.mxu0 0.0
        %1467 = vmatpush1.msra.mxu0 0.0
        %1468 = vmatprep.subr.mxu0 0.0
        %1469 = vmatpush1.msra.mxu0 0.0
        %1470 = vmatprep.subr.mxu0 0.0
        %1471 = vmatpush1.msra.mxu0 0.0
        %1472 = vmatprep.subr.mxu0 0.0
        %1473 = vmatpush1.msra.mxu0 0.0
        %1474 = vmatprep.subr.mxu0 0.0
        %1475 = vmatpush1.msra.mxu0 0.0
        %1476 = vmatprep.subr.mxu0 0.0
        %1477 = vmatpush1.msra.mxu0 0.0
        %1478 = vmatprep.subr.mxu0 0.0
        %1479 = vmatpush1.msra.mxu0 0.0
        %1480 = vmatprep.subr.mxu0 0.0
        %1481 = vmatpush1.msra.mxu0 0.0
        %1482 = vmatprep.subr.mxu0 0.0
        %1483 = vmatpush1.msra.mxu0 0.0
        %1484 = vmatprep.subr.mxu0 0.0
        %1485 = vmatpush1.msra.mxu0 0.0
        %1486 = vmatprep.subr.mxu0 0.0
        %1487 = vmatpush1.msra.mxu0 0.0
        %1488 = vmatprep.subr.mxu0 0.0
        %1489 = vmatpush1.msra.mxu0 0.0
        %1490 = vmatprep.subr.mxu0 0.0
        %1491 = vmatpush1.msra.mxu0 0.0
        %1492 = vmatprep.subr.mxu0 0.0
        %1493 = vmatpush1.msra.mxu0 0.0
        %1494 = vmatprep.subr.mxu0 0.0
        %1495 = vmatpush1.msra.mxu0 0.0
        %1496 = vmatprep.mubr.f32.mxu0 0.0
        %1497 = vmatmul.mubr.f32.gmra.mrb[0].mxu0 %v1430
        %v1498 = vpop.f32.mrb[0].mxu0
        %v1499 = vadd.f32 %v1427, %v1498
        %v1500 = vpop.f32.mrb[0].mxu0
        %1501 = vdwg.mxu0
        %s1502 = scalar_lea.vmem %s4, 32
        %v1503 = vld [vmem:[%s1502] sm:$0xff]
        %v1504 = vld [vmem:[%s1502 + $0x8] sm:$0x7]
        %s1505 = scalar_lea.vmem %s2, 8
        %v1506 = vld [vmem:[%s1505] sm:$0x7]
        %s1507 = scalar_lea.vmem %s3, 48
        %v1508 = vld [vmem:[%s1507] sm:$0xff]
        %v1509 = vld [vmem:[%s1507 + $0x8] sm:$0xff]
        %v1510 = vld [vmem:[%s1507 + $0x10] sm:$0xff]
        %v1512 = vsel %vm263, %v1506, 0
        %1514 = vmatprep.subr.mxu0 0.0
        %1515 = vmatpush1.msra.mxu0 %v1499
        %1516 = vmatprep.subr.mxu0 0.0
        %1517 = vmatpush1.msra.mxu0 0.0
        %1518 = vmatprep.subr.mxu0 0.0
        %1519 = vmatpush1.msra.mxu0 0.0
        %1520 = vmatprep.subr.mxu0 0.0
        %1521 = vmatpush1.msra.mxu0 0.0
        %1522 = vmatprep.subr.mxu0 0.0
        %1523 = vmatpush1.msra.mxu0 0.0
        %1524 = vmatprep.subr.mxu0 0.0
        %1525 = vmatpush1.msra.mxu0 0.0
        %1526 = vmatprep.subr.mxu0 0.0
        %1527 = vmatpush1.msra.mxu0 0.0
        %1528 = vmatprep.subr.mxu0 0.0
        %1529 = vmatpush1.msra.mxu0 0.0
        %1530 = vmatprep.subr.mxu0 0.0
        %1531 = vmatpush1.msra.mxu0 0.0
        %1532 = vmatprep.subr.mxu0 0.0
        %1533 = vmatpush1.msra.mxu0 0.0
        %1534 = vmatprep.subr.mxu0 0.0
        %1535 = vmatpush1.msra.mxu0 0.0
        %1536 = vmatprep.subr.mxu0 0.0
        %1537 = vmatpush1.msra.mxu0 0.0
        %1538 = vmatprep.subr.mxu0 0.0
        %1539 = vmatpush1.msra.mxu0 0.0
        %1540 = vmatprep.subr.mxu0 0.0
        %1541 = vmatpush1.msra.mxu0 0.0
        %1542 = vmatprep.subr.mxu0 0.0
        %1543 = vmatpush1.msra.mxu0 0.0
        %1544 = vmatprep.subr.mxu0 0.0
        %1545 = vmatpush1.msra.mxu0 0.0
        %1546 = vmatprep.subr.mxu0 0.0
        %1547 = vmatpush1.msra.mxu0 0.0
        %1548 = vmatprep.subr.mxu0 0.0
        %1549 = vmatpush1.msra.mxu0 0.0
        %1550 = vmatprep.subr.mxu0 0.0
        %1551 = vmatpush1.msra.mxu0 0.0
        %1552 = vmatprep.subr.mxu0 0.0
        %1553 = vmatpush1.msra.mxu0 0.0
        %1554 = vmatprep.subr.mxu0 0.0
        %1555 = vmatpush1.msra.mxu0 0.0
        %1556 = vmatprep.subr.mxu0 0.0
        %1557 = vmatpush1.msra.mxu0 0.0
        %1558 = vmatprep.subr.mxu0 0.0
        %1559 = vmatpush1.msra.mxu0 0.0
        %1560 = vmatprep.subr.mxu0 0.0
        %1561 = vmatpush1.msra.mxu0 0.0
        %1562 = vmatprep.subr.mxu0 0.0
        %1563 = vmatpush1.msra.mxu0 0.0
        %1564 = vmatprep.subr.mxu0 0.0
        %1565 = vmatpush1.msra.mxu0 0.0
        %1566 = vmatprep.subr.mxu0 0.0
        %1567 = vmatpush1.msra.mxu0 0.0
        %1568 = vmatprep.subr.mxu0 0.0
        %1569 = vmatpush1.msra.mxu0 0.0
        %1570 = vmatprep.subr.mxu0 0.0
        %1571 = vmatpush1.msra.mxu0 0.0
        %1572 = vmatprep.subr.mxu0 0.0
        %1573 = vmatpush1.msra.mxu0 0.0
        %1574 = vmatprep.subr.mxu0 0.0
        %1575 = vmatpush1.msra.mxu0 0.0
        %1576 = vmatprep.subr.mxu0 0.0
        %1577 = vmatpush1.msra.mxu0 0.0
        %1578 = vmatprep.mubr.f32.mxu0 0.0
        %1579 = vmatmul.mubr.f32.gmra.mrb[0].mxu0 %v1512
        %v1580 = vpop.f32.mrb[0].mxu0
        %v1581 = vadd.f32 0.0, %v1580
        %v1582 = vpop.f32.mrb[0].mxu0
        %1583 = vdwg.mxu0
        %1585 = vrot.lane.b32.xlu0 %v1581, 1
        %v1586 = vpop.permute.xlu0 %1585
        %v1588 = vsel %vm341, 0.0, %v1586
        %v1589 = vmul.f32 %v1588, %v346
        %v1590 = vadd.f32 %v1589, 0.0
        %1591 = vrot.lane.b32.xlu0 %v1506, 120
        %v1592 = vpop.permute.xlu0 %1591
        %v1593 = vsel %vm263, %v1592, 0
        %1595 = vmatprep.subr.mxu0 0.0
        %1596 = vmatpush1.msra.mxu0 %v1499
        %1597 = vmatprep.subr.mxu0 0.0
        %1598 = vmatpush1.msra.mxu0 0.0
        %1599 = vmatprep.subr.mxu0 0.0
        %1600 = vmatpush1.msra.mxu0 0.0
        %1601 = vmatprep.subr.mxu0 0.0
        %1602 = vmatpush1.msra.mxu0 0.0
        %1603 = vmatprep.subr.mxu0 0.0
        %1604 = vmatpush1.msra.mxu0 0.0
        %1605 = vmatprep.subr.mxu0 0.0
        %1606 = vmatpush1.msra.mxu0 0.0
        %1607 = vmatprep.subr.mxu0 0.0
        %1608 = vmatpush1.msra.mxu0 0.0
        %1609 = vmatprep.subr.mxu0 0.0
        %1610 = vmatpush1.msra.mxu0 0.0
        %1611 = vmatprep.subr.mxu0 0.0
        %1612 = vmatpush1.msra.mxu0 0.0
        %1613 = vmatprep.subr.mxu0 0.0
        %1614 = vmatpush1.msra.mxu0 0.0
        %1615 = vmatprep.subr.mxu0 0.0
        %1616 = vmatpush1.msra.mxu0 0.0
        %1617 = vmatprep.subr.mxu0 0.0
        %1618 = vmatpush1.msra.mxu0 0.0
        %1619 = vmatprep.subr.mxu0 0.0
        %1620 = vmatpush1.msra.mxu0 0.0
        %1621 = vmatprep.subr.mxu0 0.0
        %1622 = vmatpush1.msra.mxu0 0.0
        %1623 = vmatprep.subr.mxu0 0.0
        %1624 = vmatpush1.msra.mxu0 0.0
        %1625 = vmatprep.subr.mxu0 0.0
        %1626 = vmatpush1.msra.mxu0 0.0
        %1627 = vmatprep.subr.mxu0 0.0
        %1628 = vmatpush1.msra.mxu0 0.0
        %1629 = vmatprep.subr.mxu0 0.0
        %1630 = vmatpush1.msra.mxu0 0.0
        %1631 = vmatprep.subr.mxu0 0.0
        %1632 = vmatpush1.msra.mxu0 0.0
        %1633 = vmatprep.subr.mxu0 0.0
        %1634 = vmatpush1.msra.mxu0 0.0
        %1635 = vmatprep.subr.mxu0 0.0
        %1636 = vmatpush1.msra.mxu0 0.0
        %1637 = vmatprep.subr.mxu0 0.0
        %1638 = vmatpush1.msra.mxu0 0.0
        %1639 = vmatprep.subr.mxu0 0.0
        %1640 = vmatpush1.msra.mxu0 0.0
        %1641 = vmatprep.subr.mxu0 0.0
        %1642 = vmatpush1.msra.mxu0 0.0
        %1643 = vmatprep.subr.mxu0 0.0
        %1644 = vmatpush1.msra.mxu0 0.0
        %1645 = vmatprep.subr.mxu0 0.0
        %1646 = vmatpush1.msra.mxu0 0.0
        %1647 = vmatprep.subr.mxu0 0.0
        %1648 = vmatpush1.msra.mxu0 0.0
        %1649 = vmatprep.subr.mxu0 0.0
        %1650 = vmatpush1.msra.mxu0 0.0
        %1651 = vmatprep.subr.mxu0 0.0
        %1652 = vmatpush1.msra.mxu0 0.0
        %1653 = vmatprep.subr.mxu0 0.0
        %1654 = vmatpush1.msra.mxu0 0.0
        %1655 = vmatprep.subr.mxu0 0.0
        %1656 = vmatpush1.msra.mxu0 0.0
        %1657 = vmatprep.subr.mxu0 0.0
        %1658 = vmatpush1.msra.mxu0 0.0
        %1659 = vmatprep.mubr.f32.mxu0 0.0
        %1660 = vmatmul.mubr.f32.gmra.mrb[0].mxu0 %v1593
        %v1661 = vpop.f32.mrb[0].mxu0
        %v1662 = vadd.f32 0.0, %v1661
        %v1663 = vpop.f32.mrb[0].mxu0
        %1664 = vdwg.mxu0
        %v1665 = vmul.f32 %v1662, %v426
        %v1666 = vadd.f32 %v1590, %v1665
        %1667 = vrot.lane.b32.xlu0 %v1506, 112
        %v1668 = vpop.permute.xlu0 %1667
        %v1669 = vsel %vm263, %v1668, 0
        %1671 = vmatprep.subr.mxu0 0.0
        %1672 = vmatpush1.msra.mxu0 %v1499
        %1673 = vmatprep.subr.mxu0 0.0
        %1674 = vmatpush1.msra.mxu0 0.0
        %1675 = vmatprep.subr.mxu0 0.0
        %1676 = vmatpush1.msra.mxu0 0.0
        %1677 = vmatprep.subr.mxu0 0.0
        %1678 = vmatpush1.msra.mxu0 0.0
        %1679 = vmatprep.subr.mxu0 0.0
        %1680 = vmatpush1.msra.mxu0 0.0
        %1681 = vmatprep.subr.mxu0 0.0
        %1682 = vmatpush1.msra.mxu0 0.0
        %1683 = vmatprep.subr.mxu0 0.0
        %1684 = vmatpush1.msra.mxu0 0.0
        %1685 = vmatprep.subr.mxu0 0.0
        %1686 = vmatpush1.msra.mxu0 0.0
        %1687 = vmatprep.subr.mxu0 0.0
        %1688 = vmatpush1.msra.mxu0 0.0
        %1689 = vmatprep.subr.mxu0 0.0
        %1690 = vmatpush1.msra.mxu0 0.0
        %1691 = vmatprep.subr.mxu0 0.0
        %1692 = vmatpush1.msra.mxu0 0.0
        %1693 = vmatprep.subr.mxu0 0.0
        %1694 = vmatpush1.msra.mxu0 0.0
        %1695 = vmatprep.subr.mxu0 0.0
        %1696 = vmatpush1.msra.mxu0 0.0
        %1697 = vmatprep.subr.mxu0 0.0
        %1698 = vmatpush1.msra.mxu0 0.0
        %1699 = vmatprep.subr.mxu0 0.0
        %1700 = vmatpush1.msra.mxu0 0.0
        %1701 = vmatprep.subr.mxu0 0.0
        %1702 = vmatpush1.msra.mxu0 0.0
        %1703 = vmatprep.subr.mxu0 0.0
        %1704 = vmatpush1.msra.mxu0 0.0
        %1705 = vmatprep.subr.mxu0 0.0
        %1706 = vmatpush1.msra.mxu0 0.0
        %1707 = vmatprep.subr.mxu0 0.0
        %1708 = vmatpush1.msra.mxu0 0.0
        %1709 = vmatprep.subr.mxu0 0.0
        %1710 = vmatpush1.msra.mxu0 0.0
        %1711 = vmatprep.subr.mxu0 0.0
        %1712 = vmatpush1.msra.mxu0 0.0
        %1713 = vmatprep.subr.mxu0 0.0
        %1714 = vmatpush1.msra.mxu0 0.0
        %1715 = vmatprep.subr.mxu0 0.0
        %1716 = vmatpush1.msra.mxu0 0.0
        %1717 = vmatprep.subr.mxu0 0.0
        %1718 = vmatpush1.msra.mxu0 0.0
        %1719 = vmatprep.subr.mxu0 0.0
        %1720 = vmatpush1.msra.mxu0 0.0
        %1721 = vmatprep.subr.mxu0 0.0
        %1722 = vmatpush1.msra.mxu0 0.0
        %1723 = vmatprep.subr.mxu0 0.0
        %1724 = vmatpush1.msra.mxu0 0.0
        %1725 = vmatprep.subr.mxu0 0.0
        %1726 = vmatpush1.msra.mxu0 0.0
        %1727 = vmatprep.subr.mxu0 0.0
        %1728 = vmatpush1.msra.mxu0 0.0
        %1729 = vmatprep.subr.mxu0 0.0
        %1730 = vmatpush1.msra.mxu0 0.0
        %1731 = vmatprep.subr.mxu0 0.0
        %1732 = vmatpush1.msra.mxu0 0.0
        %1733 = vmatprep.subr.mxu0 0.0
        %1734 = vmatpush1.msra.mxu0 0.0
        %1735 = vmatprep.mubr.f32.mxu0 0.0
        %1736 = vmatmul.mubr.f32.gmra.mrb[0].mxu0 %v1669
        %v1737 = vpop.f32.mrb[0].mxu0
        %v1738 = vadd.f32 0.0, %v1737
        %v1739 = vpop.f32.mrb[0].mxu0
        %1740 = vdwg.mxu0
        %1742 = vrot.lane.b32.xlu0 %v1738, 127
        %v1743 = vpop.permute.xlu0 %1742
        %v1745 = vsel %vm507, %v1743, 0.0
        %v1746 = vmul.f32 %v1745, %v512
        %v1747 = vadd.f32 %v1666, %v1746
        %1749 = vset.pattern.permute.xlu0 0
        %1750 = vperm.xlu0 %1749, %v1503
        %v1751 = vpop.permute.xlu0 %1750
        %v1753 = vadd.f32 %v1747, %v1751
        %v1755 = vsel %vm263, %v1508, 0
        %1757 = vmatprep.subr.mxu0 0.0
        %1758 = vmatpush1.msra.mxu0 %v1499
        %1759 = vmatprep.subr.mxu0 0.0
        %1760 = vmatpush1.msra.mxu0 0.0
        %1761 = vmatprep.subr.mxu0 0.0
        %1762 = vmatpush1.msra.mxu0 0.0
        %1763 = vmatprep.subr.mxu0 0.0
        %1764 = vmatpush1.msra.mxu0 0.0
        %1765 = vmatprep.subr.mxu0 0.0
        %1766 = vmatpush1.msra.mxu0 0.0
        %1767 = vmatprep.subr.mxu0 0.0
        %1768 = vmatpush1.msra.mxu0 0.0
        %1769 = vmatprep.subr.mxu0 0.0
        %1770 = vmatpush1.msra.mxu0 0.0
        %1771 = vmatprep.subr.mxu0 0.0
        %1772 = vmatpush1.msra.mxu0 0.0
        %1773 = vmatprep.subr.mxu0 0.0
        %1774 = vmatpush1.msra.mxu0 0.0
        %1775 = vmatprep.subr.mxu0 0.0
        %1776 = vmatpush1.msra.mxu0 0.0
        %1777 = vmatprep.subr.mxu0 0.0
        %1778 = vmatpush1.msra.mxu0 0.0
        %1779 = vmatprep.subr.mxu0 0.0
        %1780 = vmatpush1.msra.mxu0 0.0
        %1781 = vmatprep.subr.mxu0 0.0
        %1782 = vmatpush1.msra.mxu0 0.0
        %1783 = vmatprep.subr.mxu0 0.0
        %1784 = vmatpush1.msra.mxu0 0.0
        %1785 = vmatprep.subr.mxu0 0.0
        %1786 = vmatpush1.msra.mxu0 0.0
        %1787 = vmatprep.subr.mxu0 0.0
        %1788 = vmatpush1.msra.mxu0 0.0
        %1789 = vmatprep.subr.mxu0 0.0
        %1790 = vmatpush1.msra.mxu0 0.0
        %1791 = vmatprep.subr.mxu0 0.0
        %1792 = vmatpush1.msra.mxu0 0.0
        %1793 = vmatprep.subr.mxu0 0.0
        %1794 = vmatpush1.msra.mxu0 0.0
        %1795 = vmatprep.subr.mxu0 0.0
        %1796 = vmatpush1.msra.mxu0 0.0
        %1797 = vmatprep.subr.mxu0 0.0
        %1798 = vmatpush1.msra.mxu0 0.0
        %1799 = vmatprep.subr.mxu0 0.0
        %1800 = vmatpush1.msra.mxu0 0.0
        %1801 = vmatprep.subr.mxu0 0.0
        %1802 = vmatpush1.msra.mxu0 0.0
        %1803 = vmatprep.subr.mxu0 0.0
        %1804 = vmatpush1.msra.mxu0 0.0
        %1805 = vmatprep.subr.mxu0 0.0
        %1806 = vmatpush1.msra.mxu0 0.0
        %1807 = vmatprep.subr.mxu0 0.0
        %1808 = vmatpush1.msra.mxu0 0.0
        %1809 = vmatprep.subr.mxu0 0.0
        %1810 = vmatpush1.msra.mxu0 0.0
        %1811 = vmatprep.subr.mxu0 0.0
        %1812 = vmatpush1.msra.mxu0 0.0
        %1813 = vmatprep.subr.mxu0 0.0
        %1814 = vmatpush1.msra.mxu0 0.0
        %1815 = vmatprep.subr.mxu0 0.0
        %1816 = vmatpush1.msra.mxu0 0.0
        %1817 = vmatprep.subr.mxu0 0.0
        %1818 = vmatpush1.msra.mxu0 0.0
        %1819 = vmatprep.subr.mxu0 0.0
        %1820 = vmatpush1.msra.mxu0 0.0
        %1821 = vmatprep.mubr.f32.mxu0 0.0
        %1822 = vmatmul.mubr.f32.gmra.mrb[0].mxu0 %v1755
        %v1823 = vpop.f32.mrb[0].mxu0
        %v1824 = vadd.f32 0.0, %v1823
        %v1825 = vpop.f32.mrb[0].mxu0
        %1826 = vdwg.mxu0
        %v1828 = vsel %vm263, %v1509, 0
        %1830 = vmatprep.subr.mxu0 0.0
        %1831 = vmatpush1.msra.mxu0 %v1499
        %1832 = vmatprep.subr.mxu0 0.0
        %1833 = vmatpush1.msra.mxu0 0.0
        %1834 = vmatprep.subr.mxu0 0.0
        %1835 = vmatpush1.msra.mxu0 0.0
        %1836 = vmatprep.subr.mxu0 0.0
        %1837 = vmatpush1.msra.mxu0 0.0
        %1838 = vmatprep.subr.mxu0 0.0
        %1839 = vmatpush1.msra.mxu0 0.0
        %1840 = vmatprep.subr.mxu0 0.0
        %1841 = vmatpush1.msra.mxu0 0.0
        %1842 = vmatprep.subr.mxu0 0.0
        %1843 = vmatpush1.msra.mxu0 0.0
        %1844 = vmatprep.subr.mxu0 0.0
        %1845 = vmatpush1.msra.mxu0 0.0
        %1846 = vmatprep.subr.mxu0 0.0
        %1847 = vmatpush1.msra.mxu0 0.0
        %1848 = vmatprep.subr.mxu0 0.0
        %1849 = vmatpush1.msra.mxu0 0.0
        %1850 = vmatprep.subr.mxu0 0.0
        %1851 = vmatpush1.msra.mxu0 0.0
        %1852 = vmatprep.subr.mxu0 0.0
        %1853 = vmatpush1.msra.mxu0 0.0
        %1854 = vmatprep.subr.mxu0 0.0
        %1855 = vmatpush1.msra.mxu0 0.0
        %1856 = vmatprep.subr.mxu0 0.0
        %1857 = vmatpush1.msra.mxu0 0.0
        %1858 = vmatprep.subr.mxu0 0.0
        %1859 = vmatpush1.msra.mxu0 0.0
        %1860 = vmatprep.subr.mxu0 0.0
        %1861 = vmatpush1.msra.mxu0 0.0
        %1862 = vmatprep.subr.mxu0 0.0
        %1863 = vmatpush1.msra.mxu0 0.0
        %1864 = vmatprep.subr.mxu0 0.0
        %1865 = vmatpush1.msra.mxu0 0.0
        %1866 = vmatprep.subr.mxu0 0.0
        %1867 = vmatpush1.msra.mxu0 0.0
        %1868 = vmatprep.subr.mxu0 0.0
        %1869 = vmatpush1.msra.mxu0 0.0
        %1870 = vmatprep.subr.mxu0 0.0
        %1871 = vmatpush1.msra.mxu0 0.0
        %1872 = vmatprep.subr.mxu0 0.0
        %1873 = vmatpush1.msra.mxu0 0.0
        %1874 = vmatprep.subr.mxu0 0.0
        %1875 = vmatpush1.msra.mxu0 0.0
        %1876 = vmatprep.subr.mxu0 0.0
        %1877 = vmatpush1.msra.mxu0 0.0
        %1878 = vmatprep.subr.mxu0 0.0
        %1879 = vmatpush1.msra.mxu0 0.0
        %1880 = vmatprep.subr.mxu0 0.0
        %1881 = vmatpush1.msra.mxu0 0.0
        %1882 = vmatprep.subr.mxu0 0.0
        %1883 = vmatpush1.msra.mxu0 0.0
        %1884 = vmatprep.subr.mxu0 0.0
        %1885 = vmatpush1.msra.mxu0 0.0
        %1886 = vmatprep.subr.mxu0 0.0
        %1887 = vmatpush1.msra.mxu0 0.0
        %1888 = vmatprep.subr.mxu0 0.0
        %1889 = vmatpush1.msra.mxu0 0.0
        %1890 = vmatprep.subr.mxu0 0.0
        %1891 = vmatpush1.msra.mxu0 0.0
        %1892 = vmatprep.subr.mxu0 0.0
        %1893 = vmatpush1.msra.mxu0 0.0
        %1894 = vmatprep.mubr.f32.mxu0 0.0
        %1895 = vmatmul.mubr.f32.gmra.mrb[0].mxu0 %v1828
        %v1896 = vpop.f32.mrb[0].mxu0
        %v1897 = vadd.f32 0.0, %v1896
        %v1898 = vpop.f32.mrb[0].mxu0
        %1899 = vdwg.mxu0
        %v1901 = vsel %vm263, %v1510, 0
        %1903 = vmatprep.subr.mxu0 0.0
        %1904 = vmatpush1.msra.mxu0 %v1499
        %1905 = vmatprep.subr.mxu0 0.0
        %1906 = vmatpush1.msra.mxu0 0.0
        %1907 = vmatprep.subr.mxu0 0.0
        %1908 = vmatpush1.msra.mxu0 0.0
        %1909 = vmatprep.subr.mxu0 0.0
        %1910 = vmatpush1.msra.mxu0 0.0
        %1911 = vmatprep.subr.mxu0 0.0
        %1912 = vmatpush1.msra.mxu0 0.0
        %1913 = vmatprep.subr.mxu0 0.0
        %1914 = vmatpush1.msra.mxu0 0.0
        %1915 = vmatprep.subr.mxu0 0.0
        %1916 = vmatpush1.msra.mxu0 0.0
        %1917 = vmatprep.subr.mxu0 0.0
        %1918 = vmatpush1.msra.mxu0 0.0
        %1919 = vmatprep.subr.mxu0 0.0
        %1920 = vmatpush1.msra.mxu0 0.0
        %1921 = vmatprep.subr.mxu0 0.0
        %1922 = vmatpush1.msra.mxu0 0.0
        %1923 = vmatprep.subr.mxu0 0.0
        %1924 = vmatpush1.msra.mxu0 0.0
        %1925 = vmatprep.subr.mxu0 0.0
        %1926 = vmatpush1.msra.mxu0 0.0
        %1927 = vmatprep.subr.mxu0 0.0
        %1928 = vmatpush1.msra.mxu0 0.0
        %1929 = vmatprep.subr.mxu0 0.0
        %1930 = vmatpush1.msra.mxu0 0.0
        %1931 = vmatprep.subr.mxu0 0.0
        %1932 = vmatpush1.msra.mxu0 0.0
        %1933 = vmatprep.subr.mxu0 0.0
        %1934 = vmatpush1.msra.mxu0 0.0
        %1935 = vmatprep.subr.mxu0 0.0
        %1936 = vmatpush1.msra.mxu0 0.0
        %1937 = vmatprep.subr.mxu0 0.0
        %1938 = vmatpush1.msra.mxu0 0.0
        %1939 = vmatprep.subr.mxu0 0.0
        %1940 = vmatpush1.msra.mxu0 0.0
        %1941 = vmatprep.subr.mxu0 0.0
        %1942 = vmatpush1.msra.mxu0 0.0
        %1943 = vmatprep.subr.mxu0 0.0
        %1944 = vmatpush1.msra.mxu0 0.0
        %1945 = vmatprep.subr.mxu0 0.0
        %1946 = vmatpush1.msra.mxu0 0.0
        %1947 = vmatprep.subr.mxu0 0.0
        %1948 = vmatpush1.msra.mxu0 0.0
        %1949 = vmatprep.subr.mxu0 0.0
        %1950 = vmatpush1.msra.mxu0 0.0
        %1951 = vmatprep.subr.mxu0 0.0
        %1952 = vmatpush1.msra.mxu0 0.0
        %1953 = vmatprep.subr.mxu0 0.0
        %1954 = vmatpush1.msra.mxu0 0.0
        %1955 = vmatprep.subr.mxu0 0.0
        %1956 = vmatpush1.msra.mxu0 0.0
        %1957 = vmatprep.subr.mxu0 0.0
        %1958 = vmatpush1.msra.mxu0 0.0
        %1959 = vmatprep.subr.mxu0 0.0
        %1960 = vmatpush1.msra.mxu0 0.0
        %1961 = vmatprep.subr.mxu0 0.0
        %1962 = vmatpush1.msra.mxu0 0.0
        %1963 = vmatprep.subr.mxu0 0.0
        %1964 = vmatpush1.msra.mxu0 0.0
        %1965 = vmatprep.subr.mxu0 0.0
        %1966 = vmatpush1.msra.mxu0 0.0
        %1967 = vmatprep.mubr.f32.mxu0 0.0
        %1968 = vmatmul.mubr.f32.gmra.mrb[0].mxu0 %v1901
        %v1969 = vpop.f32.mrb[0].mxu0
        %v1970 = vadd.f32 0.0, %v1969
        %v1971 = vpop.f32.mrb[0].mxu0
        %1972 = vdwg.mxu0
        %v1973 = vadd.f32 %v740, %v1753
        %v1974 = vlaneseq
        %v1975 = vshrl.u32 %v1974, 7
        %v1976 = vsub.s32 0, %v1975
        %v1977 = vrot.slane %v1973, %v1976
        %v1978 = vsub.f32 %v1977, %v250
        %v1979 = vsub.f32 %v1977, %v251
        %v1980 = vand.u32 2147483647, %v1978
        %v1981 = vand.u32 2147483647, %v1979
        %v1982 = vsub.f32 1.0, %v1980
        %v1983 = vsub.f32 1.0, %v1981
        %v1984 = vmax.f32 %v1982, 0.0
        %v1985 = vmax.f32 %v1983, 0.0
        %1986 = vst.msk [vmem:[#allocation2] sm:$0xff] %vm754, %v1984
        %1987 = vst.msk [vmem:[#allocation2 + $0x8] sm:$0xff] %vm754, %v1985
        %v1988 = vadd.f32 %v757, %v1753
        %v1989 = vlaneseq
        %v1990 = vshrl.u32 %v1989, 7
        %v1991 = vsub.s32 1, %v1990
        %v1992 = vrot.slane %v1988, %v1991
        %v1993 = vsub.f32 %v1992, %v250
        %v1994 = vsub.f32 %v1992, %v251
        %v1995 = vand.u32 2147483647, %v1993
        %v1996 = vand.u32 2147483647, %v1994
        %v1997 = vsub.f32 1.0, %v1995
        %v1998 = vsub.f32 1.0, %v1996
        %v1999 = vmax.f32 %v1997, 0.0
        %v2000 = vmax.f32 %v1998, 0.0
        %2001 = vst.msk [vmem:[#allocation2 + $0x10] sm:$0xff] %vm754, %v1999
        %2002 = vst.msk [vmem:[#allocation2 + $0x18] sm:$0xff] %vm754, %v2000
        %v2003 = vadd.f32 %v773, %v1753
        %v2004 = vlaneseq
        %v2005 = vshrl.u32 %v2004, 7
        %v2006 = vsub.s32 2, %v2005
        %v2007 = vrot.slane %v2003, %v2006
        %v2008 = vsub.f32 %v2007, %v250
        %v2009 = vsub.f32 %v2007, %v251
        %v2010 = vand.u32 2147483647, %v2008
        %v2011 = vand.u32 2147483647, %v2009
        %v2012 = vsub.f32 1.0, %v2010
        %v2013 = vsub.f32 1.0, %v2011
        %v2014 = vmax.f32 %v2012, 0.0
        %v2015 = vmax.f32 %v2013, 0.0
        %2016 = vst.msk [vmem:[#allocation2 + $0x20] sm:$0xff] %vm754, %v2014
        %2017 = vst.msk [vmem:[#allocation2 + $0x28] sm:$0xff] %vm754, %v2015
        %2019 = vrot.lane.b32.xlu0 %v1897, 16
        %v2020 = vpop.permute.xlu0 %2019
        %2023 = vrot.lane.b32.xlu0 %v1970, 32
        %v2024 = vpop.permute.xlu0 %2023
        %v2026 = vsel %vm754, %v1824, %v2020
        %v2027 = vsel %vm798, %v2026, %v2024
        %v2028 = vld [vmem:[#allocation2] sm:$0xff]
        %v2029 = vld [vmem:[#allocation2 + $0x8] sm:$0xff]
        %v2030 = vld [vmem:[#allocation2 + $0x10] sm:$0xff]
        %v2031 = vld [vmem:[#allocation2 + $0x18] sm:$0xff]
        %v2032 = vld [vmem:[#allocation2 + $0x20] sm:$0xff]
        %v2033 = vld [vmem:[#allocation2 + $0x28] sm:$0xff]
        %2035 = vset.pattern.permute.xlu0 0
        %2036 = vperm.xlu0 %2035, %v1504
        %v2037 = vpop.permute.xlu0 %2036
        %v2038 = vrot.slane %v1751, 3
        %v2039 = vrot.slane %v2037, 3
        %v2040 = vsel %vm810, %v2038, %v2039
        %v2043 = vsel %vm815, %v2027, 0
        %2045 = vmatprep.subr.mxu0 0.0
        %2046 = vmatpush1.msra.mxu0 %v2028
        %2047 = vmatprep.subr.mxu0 0.0
        %2048 = vmatpush1.msra.mxu0 %v2029
        %2049 = vmatprep.subr.mxu0 0.0
        %2050 = vmatpush1.msra.mxu0 %v2030
        %2051 = vmatprep.subr.mxu0 0.0
        %2052 = vmatpush1.msra.mxu0 %v2031
        %2053 = vmatprep.subr.mxu0 0.0
        %2054 = vmatpush1.msra.mxu0 %v2032
        %2055 = vmatprep.subr.mxu0 0.0
        %2056 = vmatpush1.msra.mxu0 %v2033
        %2057 = vmatprep.subr.mxu0 0.0
        %2058 = vmatpush1.msra.mxu0 0.0
        %2059 = vmatprep.subr.mxu0 0.0
        %2060 = vmatpush1.msra.mxu0 0.0
        %2061 = vmatprep.subr.mxu0 0.0
        %2062 = vmatpush1.msra.mxu0 0.0
        %2063 = vmatprep.subr.mxu0 0.0
        %2064 = vmatpush1.msra.mxu0 0.0
        %2065 = vmatprep.subr.mxu0 0.0
        %2066 = vmatpush1.msra.mxu0 0.0
        %2067 = vmatprep.subr.mxu0 0.0
        %2068 = vmatpush1.msra.mxu0 0.0
        %2069 = vmatprep.subr.mxu0 0.0
        %2070 = vmatpush1.msra.mxu0 0.0
        %2071 = vmatprep.subr.mxu0 0.0
        %2072 = vmatpush1.msra.mxu0 0.0
        %2073 = vmatprep.subr.mxu0 0.0
        %2074 = vmatpush1.msra.mxu0 0.0
        %2075 = vmatprep.subr.mxu0 0.0
        %2076 = vmatpush1.msra.mxu0 0.0
        %2077 = vmatprep.subr.mxu0 0.0
        %2078 = vmatpush1.msra.mxu0 0.0
        %2079 = vmatprep.subr.mxu0 0.0
        %2080 = vmatpush1.msra.mxu0 0.0
        %2081 = vmatprep.subr.mxu0 0.0
        %2082 = vmatpush1.msra.mxu0 0.0
        %2083 = vmatprep.subr.mxu0 0.0
        %2084 = vmatpush1.msra.mxu0 0.0
        %2085 = vmatprep.subr.mxu0 0.0
        %2086 = vmatpush1.msra.mxu0 0.0
        %2087 = vmatprep.subr.mxu0 0.0
        %2088 = vmatpush1.msra.mxu0 0.0
        %2089 = vmatprep.subr.mxu0 0.0
        %2090 = vmatpush1.msra.mxu0 0.0
        %2091 = vmatprep.subr.mxu0 0.0
        %2092 = vmatpush1.msra.mxu0 0.0
        %2093 = vmatprep.subr.mxu0 0.0
        %2094 = vmatpush1.msra.mxu0 0.0
        %2095 = vmatprep.subr.mxu0 0.0
        %2096 = vmatpush1.msra.mxu0 0.0
        %2097 = vmatprep.subr.mxu0 0.0
        %2098 = vmatpush1.msra.mxu0 0.0
        %2099 = vmatprep.subr.mxu0 0.0
        %2100 = vmatpush1.msra.mxu0 0.0
        %2101 = vmatprep.subr.mxu0 0.0
        %2102 = vmatpush1.msra.mxu0 0.0
        %2103 = vmatprep.subr.mxu0 0.0
        %2104 = vmatpush1.msra.mxu0 0.0
        %2105 = vmatprep.subr.mxu0 0.0
        %2106 = vmatpush1.msra.mxu0 0.0
        %2107 = vmatprep.subr.mxu0 0.0
        %2108 = vmatpush1.msra.mxu0 0.0
        %2109 = vmatprep.mubr.f32.mxu0 0.0
        %2110 = vmatmul.mubr.f32.gmra.mrb[0].mxu0 %v2043
        %v2111 = vpop.f32.mrb[0].mxu0
        %v2112 = vadd.f32 %v2040, %v2111
        %v2113 = vpop.f32.mrb[0].mxu0
        %2114 = vdwg.mxu0
        %v2115 = vld [vmem:[%s5] sm:$0xff]
        %v2117 = vsel %vm263, %v2115, 0
        %2119 = vmatprep.subr.mxu0 0.0
        %2120 = vmatpush1.msra.mxu0 %v256
        %2121 = vmatprep.subr.mxu0 0.0
        %2122 = vmatpush1.msra.mxu0 0.0
        %2123 = vmatprep.subr.mxu0 0.0
        %2124 = vmatpush1.msra.mxu0 0.0
        %2125 = vmatprep.subr.mxu0 0.0
        %2126 = vmatpush1.msra.mxu0 0.0
        %2127 = vmatprep.subr.mxu0 0.0
        %2128 = vmatpush1.msra.mxu0 0.0
        %2129 = vmatprep.subr.mxu0 0.0
        %2130 = vmatpush1.msra.mxu0 0.0
        %2131 = vmatprep.subr.mxu0 0.0
        %2132 = vmatpush1.msra.mxu0 0.0
        %2133 = vmatprep.subr.mxu0 0.0
        %2134 = vmatpush1.msra.mxu0 0.0
        %2135 = vmatprep.subr.mxu0 0.0
        %2136 = vmatpush1.msra.mxu0 0.0
        %2137 = vmatprep.subr.mxu0 0.0
        %2138 = vmatpush1.msra.mxu0 0.0
        %2139 = vmatprep.subr.mxu0 0.0
        %2140 = vmatpush1.msra.mxu0 0.0
        %2141 = vmatprep.subr.mxu0 0.0
        %2142 = vmatpush1.msra.mxu0 0.0
        %2143 = vmatprep.subr.mxu0 0.0
        %2144 = vmatpush1.msra.mxu0 0.0
        %2145 = vmatprep.subr.mxu0 0.0
        %2146 = vmatpush1.msra.mxu0 0.0
        %2147 = vmatprep.subr.mxu0 0.0
        %2148 = vmatpush1.msra.mxu0 0.0
        %2149 = vmatprep.subr.mxu0 0.0
        %2150 = vmatpush1.msra.mxu0 0.0
        %2151 = vmatprep.subr.mxu0 0.0
        %2152 = vmatpush1.msra.mxu0 0.0
        %2153 = vmatprep.subr.mxu0 0.0
        %2154 = vmatpush1.msra.mxu0 0.0
        %2155 = vmatprep.subr.mxu0 0.0
        %2156 = vmatpush1.msra.mxu0 0.0
        %2157 = vmatprep.subr.mxu0 0.0
        %2158 = vmatpush1.msra.mxu0 0.0
        %2159 = vmatprep.subr.mxu0 0.0
        %2160 = vmatpush1.msra.mxu0 0.0
        %2161 = vmatprep.subr.mxu0 0.0
        %2162 = vmatpush1.msra.mxu0 0.0
        %2163 = vmatprep.subr.mxu0 0.0
        %2164 = vmatpush1.msra.mxu0 0.0
        %2165 = vmatprep.subr.mxu0 0.0
        %2166 = vmatpush1.msra.mxu0 0.0
        %2167 = vmatprep.subr.mxu0 0.0
        %2168 = vmatpush1.msra.mxu0 0.0
        %2169 = vmatprep.subr.mxu0 0.0
        %2170 = vmatpush1.msra.mxu0 0.0
        %2171 = vmatprep.subr.mxu0 0.0
        %2172 = vmatpush1.msra.mxu0 0.0
        %2173 = vmatprep.subr.mxu0 0.0
        %2174 = vmatpush1.msra.mxu0 0.0
        %2175 = vmatprep.subr.mxu0 0.0
        %2176 = vmatpush1.msra.mxu0 0.0
        %2177 = vmatprep.subr.mxu0 0.0
        %2178 = vmatpush1.msra.mxu0 0.0
        %2179 = vmatprep.subr.mxu0 0.0
        %2180 = vmatpush1.msra.mxu0 0.0
        %2181 = vmatprep.subr.mxu0 0.0
        %2182 = vmatpush1.msra.mxu0 0.0
        %2183 = vmatprep.mubr.f32.mxu0 0.0
        %2184 = vmatmul.mubr.f32.gmra.mrb[0].mxu0 %v2117
        %v2185 = vpop.f32.mrb[0].mxu0
        %v2186 = vadd.f32 0.0, %v2185
        %v2187 = vpop.f32.mrb[0].mxu0
        %2188 = vdwg.mxu0
        %v2189 = vadd.f32 %v2112, %v2186
        %2190 = vst.msk [vmem:[%s242] sm:$0xff] %vm754, %v2189
        %s2191 = sand.u32 %s159, 1
        %s2192 = scalar_lea.sflag [#allocation4], %s2191
        %s2193 = sand.u32 %s159, 1
        %s2194 = smul.addr %s2193, 8
        %s2195 = scalar_lea.vmem [#allocation3], %s2194
        // Predicated region
        $region45: #{tpu_custom_call.1} parent=43 // pred_check
          %p2196 = pneg %p169
        $region46: #{tpu_custom_call.1} parent=43 // pred_check_branch
          %2198 = sbr.rel (%p2196) target = $region48
        $region47: #{tpu_custom_call.1} parent=43 // pred_region
          %s2200 = ssub.s32 128, 128
          %2201 = vsyncadd %s2192, %s2200
          %s2202 = smul.addr %s20, 128
          %s2203 = scalar_lea.hbm %s6, %s2202
          %s2205 = sshll.u32 %s2195, 4
          %s2206 = int_to_ptr.vmem [resolvable:$true] %s2205
          %2208 = dma.vmem_to_hbm [thread:$0]  %s2206, 128, %s2203, %s2192
        $region48: #{tpu_custom_call.1} parent=43 // pred_fallthru
          _
      $region44: #{tpu_custom_call.1} parent=5 // pred_fallthru
        _
      %p2209 = scmp.le.s32.totalorder 2, %s15
      // Predicated region
      $region49: #{tpu_custom_call.1} parent=5 // pred_check
        %p2210 = pneg %p2209
      $region50: #{tpu_custom_call.1} parent=5 // pred_check_branch
        %2212 = sbr.rel (%p2210) target = $region52
      $region51: #{tpu_custom_call.1} parent=5 // pred_region
        %s2213 = ssub.s32 %s15, 2
        // Predicated region
        $region53: #{tpu_custom_call.1} parent=51 // pred_check
          %p2214 = pneg %p175
        $region54: #{tpu_custom_call.1} parent=51 // pred_check_branch
          %2216 = sbr.rel (%p2214) target = $region56
        $region55: #{tpu_custom_call.1} parent=51 // pred_region
          %s2217 = sand.u32 %s160, 1
          %s2218 = scalar_lea.sflag [#allocation4], %s2217
          %s2219 = sand.u32 %s160, 1
          %s2220 = smul.addr %s2219, 8
          %s2221 = scalar_lea.vmem [#allocation3], %s2220
          %2222 = dma.done %s2218, 128
        $region56: #{tpu_custom_call.1} parent=51 // pred_fallthru
          _
      $region52: #{tpu_custom_call.1} parent=5 // pred_fallthru
        _
    $region6: #{tpu_custom_call.1} parent=1 // loop_footer
      %s19 = sadd.s32 1, %s15
    $region7: #{tpu_custom_call.1} parent=1 // loop_footer_branch
      %14 = sbr.rel target = $region3
    $region8: #{tpu_custom_call.1} parent=1 // loop_exit
      _
    %2223 = vsyncpa [#allocation4], 1
    %s2224 = scalar_lea.sflag [#allocation4], 1
    %2225 = vsyncpa %s2224, 1

</llo_original>
